<compile_context>
chip_gen: v7x
topology: tpu7x:2x2x1
jax: 0.10.0
libtpu: 0.0.40
codegen_flags: <defaults>
</compile_context>

<pallas_src>
import functools

import jax
import jax.numpy as jnp
from jax.experimental import pallas as pl
from jax.experimental.pallas import tpu as pltpu


def _mha_kernel(x_ref, y_ref, wq_ref, bq_ref, wkv_ref, bkv_ref, wp_ref, bp_ref,
                out_ref, *rest, num_heads, head_chunk, scale,
                return_attention, approx_recip):
    if return_attention:
        attn_ref, q_s, kv_s, ctx_s = rest
    else:
        attn_ref = None
        q_s, kv_s, ctx_s = rest

    tn, c = q_s.shape
    m = kv_s.shape[0]
    hd = c // num_heads

    # --- fused K/V projection: computed once per batch (qi == 0), cached -----
    @pl.when(pl.program_id(1) == 0)
    def _():
        kv = (jnp.dot(y_ref[0], wkv_ref[...], preferred_element_type=jnp.float32)
              + bkv_ref[0])                                   # (M, 2C) f32 acc
        kv_s[...] = kv.astype(kv_s.dtype)

    # --- Q projection for this query tile; softmax scale folded in -----------
    q = (jnp.dot(x_ref[0], wq_ref[...], preferred_element_type=jnp.float32)
         + bq_ref[0]) * scale                                 # (TN, C) f32 acc
    q_s[...] = q.astype(q_s.dtype)

    # --- scores / softmax / apply, chunked over heads to bound live vregs ----
    n_chunks = num_heads // head_chunk
    for ci in range(n_chunks):
        lo = ci * head_chunk * hd
        w = head_chunk * hd
        qc = q_s[:, lo:lo + w].reshape(tn, head_chunk, hd)
        kc = kv_s[:, lo:lo + w].reshape(m, head_chunk, hd)
        vc = kv_s[:, c + lo:c + lo + w].reshape(m, head_chunk, hd)

        s = jnp.einsum("nhd,mhd->hnm", qc, kc,
                       preferred_element_type=jnp.float32)    # (hc, TN, M) f32
        s = s - jnp.max(s, axis=-1, keepdims=True)
        e = jnp.exp(s)
        denom = jnp.sum(e, axis=-1, keepdims=True)
        # exact reciprocal when the map is returned (rows must sum to 1),
        # EUP approx reciprocal otherwise (frees the VALU).
        a = e * pl.reciprocal(denom, approx=approx_recip)

        if attn_ref is not None:
            attn_ref[0, ci * head_chunk:(ci + 1) * head_chunk] = (
                a.astype(attn_ref.dtype))

        ctx_c = jnp.einsum("hnm,mhd->nhd", a.astype(kv_s.dtype), vc,
                           preferred_element_type=jnp.float32)
        ctx_s[:, lo:lo + w] = ctx_c.reshape(tn, w).astype(ctx_s.dtype)

    # --- single fused output projection ---------------------------------------
    out = (jnp.dot(ctx_s[...], wp_ref[...], preferred_element_type=jnp.float32)
           + bp_ref[0])
    out_ref[0] = out.astype(out_ref.dtype)


def _vmem_capacity_bytes():
    try:
        return int(pltpu.get_tpu_info().vmem_capacity_bytes)
    except Exception:
        return 64 * 1024 * 1024          # conservative (v7x per-TC) fallback


def _pick_head_chunk(num_heads, tn, m):
    """Largest divisor of num_heads keeping live f32 (hc,TN,M) planes ~<=6 MiB."""
    per_head = 8 * tn * m                # ~two live f32 (TN, M) planes per head
    hc = max(1, min(num_heads, (6 * 1024 * 1024) // max(per_head, 1)))
    while num_heads % hc:
        hc -= 1
    return hc


def _vmem_bytes(tn, m, c, d, num_heads, hc, in_sz, cmp_sz, out_sz, attn_sz,
                return_attention):
    dbl = 2                                                  # double-buffered blocks
    blocks = dbl * in_sz * (tn * c + m * d)                  # x tile + resident y
    blocks += dbl * (cmp_sz * (2 * c * c + d * 2 * c) + 16 * c)   # weights + biases
    blocks += dbl * out_sz * tn * c                          # out tile
    if return_attention:
        blocks += dbl * attn_sz * num_heads * tn * m         # attention tile
    scratch = cmp_sz * (m * 2 * c + 2 * tn * c)              # kv / q / ctx caches
    live = 3 * 4 * hc * tn * m                               # s/e/a per head chunk
    return blocks + scratch + live


def _pick_q_tile(n, budget_fn, vmem_cap):
    """Largest 128-aligned tile dividing N whose footprint fits ~80% of VMEM."""
    fitting = [t for t in (512, 256, 128)
               if n % t == 0 and budget_fn(t) <= 0.8 * vmem_cap]
    if fitting:
        return fitting[0]
    aligned = [t for t in (128, 256, 512) if n % t == 0]
    if aligned:
        return aligned[0]
    # TODO(synk): pad/mask ragged N instead of one full-N tile.
    return n


def multi_head_attention(x, y, params, num_heads, *,
                         return_attention=True, attn_dtype=None,
                         attn_layout="bnmh"):
    """Pallas forward. Returns (out[B,N,C], attention) like the torch module.
    attention is (B,N,M,H) for attn_layout='bnmh' (torch parity), lane-dense
    (B,H,N,M) for 'bhnm', or None when return_attention=False."""
    b, n, c = x.shape
    _, m, d = y.shape
    assert c % num_heads == 0
    hd = c // num_heads
    scale = hd ** (-0.5)

    wq, bq, wkv, bkv, wp, bp = (params["wq"], params["bq"], params["wkv"],
                                params["bkv"], params["wp"], params["bp"])

    compute_dtype = x.dtype                      # bf16 in -> bf16 MXU operands
    if attn_dtype is None:
        attn_dtype = x.dtype

    # Weights in the compute dtype (cast once, outside the grid loop); biases
    # stay f32 since they are added to f32 accumulators.
    wq_c = wq.astype(compute_dtype)
    wkv_c = wkv.astype(compute_dtype)
    wp_c = wp.astype(compute_dtype)
    bq2 = bq.reshape(1, c).astype(jnp.float32)
    bkv2 = bkv.reshape(1, 2 * c).astype(jnp.float32)
    bp2 = bp.reshape(1, c).astype(jnp.float32)

    in_sz = jnp.dtype(x.dtype).itemsize
    cmp_sz = jnp.dtype(compute_dtype).itemsize
    out_sz = jnp.dtype(x.dtype).itemsize
    attn_sz = jnp.dtype(attn_dtype).itemsize
    vmem_cap = _vmem_capacity_bytes()

    def budget(t):
        hc = _pick_head_chunk(num_heads, t, m)
        return _vmem_bytes(t, m, c, d, num_heads, hc, in_sz, cmp_sz,
                           out_sz, attn_sz, return_attention)

    tn = _pick_q_tile(n, budget, vmem_cap)
    head_chunk = _pick_head_chunk(num_heads, tn, m)
    grid = (b, n // tn)

    vmem_limit = int(min(int(0.9 * vmem_cap),
                         max(32 * 1024 * 1024, int(1.25 * budget(tn)))))

    kernel = functools.partial(
        _mha_kernel, num_heads=num_heads, head_chunk=head_chunk, scale=scale,
        return_attention=return_attention,
        approx_recip=not return_attention)

    in_specs = [
        pl.BlockSpec((1, tn, c), lambda bi, qi: (bi, qi, 0)),   # x (query tile)
        pl.BlockSpec((1, m, d), lambda bi, qi: (bi, 0, 0)),     # y (resident over qi)
        pl.BlockSpec((c, c), lambda bi, qi: (0, 0)),            # wq
        pl.BlockSpec((1, c), lambda bi, qi: (0, 0)),            # bq
        pl.BlockSpec((d, 2 * c), lambda bi, qi: (0, 0)),        # wkv (fused K/V)
        pl.BlockSpec((1, 2 * c), lambda bi, qi: (0, 0)),        # bkv
        pl.BlockSpec((c, c), lambda bi, qi: (0, 0)),            # wp
        pl.BlockSpec((1, c), lambda bi, qi: (0, 0)),            # bp
    ]
    out_shape = [jax.ShapeDtypeStruct((b, n, c), x.dtype)]
    out_specs = [pl.BlockSpec((1, tn, c), lambda bi, qi: (bi, qi, 0))]
    if return_attention:
        # Lane-dense (B, H, N, M) inside the kernel; 'bnmh' (tiny-H last dim)
        # would force masked partial stores.
        out_shape.append(jax.ShapeDtypeStruct((b, num_heads, n, m), attn_dtype))
        out_specs.append(
            pl.BlockSpec((1, num_heads, tn, m), lambda bi, qi: (bi, 0, qi, 0)))

    scratch_shapes = [
        pltpu.VMEM((tn, c), compute_dtype),        # Q cache for this tile
        pltpu.VMEM((m, 2 * c), compute_dtype),     # fused K/V cache (per batch)
        pltpu.VMEM((tn, c), compute_dtype),        # context (pre-projection)
    ]

    # Advisory cost estimate (K/V projection counted once per batch — now true).
    flops = 2 * b * (n * c * c                     # Q projection
                     + m * d * 2 * c               # fused K/V projection (cached)
                     + 2 * num_heads * n * m * hd  # scores + apply
                     + n * c * c)                  # output projection
    transcendentals = b * num_heads * n * m        # exp
    bytes_accessed = int(
        x.size * in_sz + y.size * in_sz
        + (wq.size + wkv.size + wp.size) * cmp_sz
        + (bq.size + bkv.size + bp.size) * 4
        + b * n * c * out_sz
        + (b * num_heads * n * m * attn_sz if return_attention else 0))

    results = pl.pallas_call(
        kernel,
        out_shape=tuple(out_shape),
        grid_spec=pltpu.PrefetchScalarGridSpec(
            num_scalar_prefetch=0,
            grid=grid,
            in_specs=in_specs,
            out_specs=tuple(out_specs),
            scratch_shapes=scratch_shapes,
        ),
        compiler_params=pltpu.CompilerParams(
            # qi must be sequential per batch for the cached K/V projection.
            dimension_semantics=("parallel", "arbitrary"),
            vmem_limit_bytes=vmem_limit,
        ),
        cost_estimate=pl.CostEstimate(
            flops=flops,
            transcendentals=transcendentals,
            bytes_accessed=bytes_accessed),
    )(x, y, wq_c, bq2, wkv_c, bkv2, wp_c, bp2)

    if return_attention:
        out, attn_bhnm = results
        if attn_layout == "bhnm":
            return out, attn_bhnm
        return out, jnp.transpose(attn_bhnm, (0, 2, 3, 1))    # torch 'bnmh'
    return results[0], None


def mha_reference(x, y, params, num_heads):
    b, n, c = x.shape
    _, m, d = y.shape
    hd = c // num_heads
    scale = hd ** (-0.5)
    q = (x @ params["wq"] + params["bq"]).reshape(b, n, num_heads, hd)
    kv = (y @ params["wkv"] + params["bkv"]).reshape(b, m, 2, num_heads, hd)
    k, v = kv[:, :, 0], kv[:, :, 1]
    att = jnp.einsum("bnhd,bmhd->bnmh", q, k) * scale
    att = jax.nn.softmax(att, axis=2)
    out = jnp.einsum("bnmh,bmhd->bnhd", att, v).reshape(b, n, c)
    out = out @ params["wp"] + params["bp"]
    return out, att


def init_params(key, dim_self, dim_ref):
    ks = jax.random.split(key, 6)
    return {
        "wq":  jax.random.normal(ks[0], (dim_self, dim_self), jnp.float32) * 0.05,
        "bq":  jax.random.normal(ks[1], (dim_self,), jnp.float32) * 0.01,
        "wkv": jax.random.normal(ks[2], (dim_ref, dim_self * 2), jnp.float32) * 0.05,
        "bkv": jax.random.normal(ks[3], (dim_self * 2,), jnp.float32) * 0.01,
        "wp":  jax.random.normal(ks[4], (dim_self, dim_self), jnp.float32) * 0.05,
        "bp":  jax.random.normal(ks[5], (dim_self,), jnp.float32) * 0.01,
    }


if __name__ == "__main__":
    B, N, C = 2, 8, 32          # batch, sequence, dim_self
    NUM_HEADS = 4
    DIM_REF = C                 # self-attention: y = x

    key = jax.random.PRNGKey(0)
    kx, kp = jax.random.split(key)
    x = jax.random.normal(kx, (B, N, C), jnp.float32)
    params = init_params(kp, C, DIM_REF)

    out, attn = multi_head_attention(x, x, params, NUM_HEADS)
    out = jax.block_until_ready(out)
    attn = jax.block_until_ready(attn)

    out_ref, attn_ref = mha_reference(x, x, params, NUM_HEADS)

    assert out.shape == (B, N, C)
    assert attn.shape == (B, N, N, NUM_HEADS)
    # attention path uses exact softmax reciprocal -> tight tolerance
    assert jnp.allclose(out, out_ref, atol=2e-3, rtol=2e-3)
    assert jnp.allclose(attn, attn_ref, atol=2e-3, rtol=2e-3)

    # Attention-free fast path: skips the dominant HBM write and uses the EUP
    # approx reciprocal (~1e-3 relative) for the softmax denominator.
    out_only, none_attn = multi_head_attention(x, x, params, NUM_HEADS,
                                               return_attention=False)
    out_only = jax.block_until_ready(out_only)
    assert none_attn is None
    assert jnp.allclose(out_only, out_ref, atol=5e-3, rtol=5e-3)

    print("KERNEL_OK")
</pallas_src>

<mosaic_0001>
module attributes {stable_mosaic.version = 11 : i64} {
  func.func @_mha_kernel(%arg0: i32, %arg1: i32, %arg2: memref<1x8x32xf32, #tpu.memory_space<vmem>>, %arg3: memref<1x8x32xf32, #tpu.memory_space<vmem>>, %arg4: memref<32x32xf32, #tpu.memory_space<vmem>>, %arg5: memref<1x32xf32, #tpu.memory_space<vmem>>, %arg6: memref<32x64xf32, #tpu.memory_space<vmem>>, %arg7: memref<1x64xf32, #tpu.memory_space<vmem>>, %arg8: memref<32x32xf32, #tpu.memory_space<vmem>>, %arg9: memref<1x32xf32, #tpu.memory_space<vmem>>, %arg10: memref<1x8x32xf32, #tpu.memory_space<vmem>>, %arg11: memref<1x4x8x8xf32, #tpu.memory_space<vmem>>, %arg12: memref<8x32xf32, #tpu.memory_space<vmem>>, %arg13: memref<8x64xf32, #tpu.memory_space<vmem>>, %arg14: memref<8x32xf32, #tpu.memory_space<vmem>>) attributes {dimension_semantics = [#tpu.dimension_semantics<parallel>, #tpu.dimension_semantics<arbitrary>], iteration_bounds = array<i64: 2, 1>, scalar_prefetch = 0 : i64, scratch_operands = 3 : i64, tpu.core_type = #tpu.core_type<tc>, window_params = [{transform_indices = @transform_0, window_bounds = array<i64: 1, 8, 32>}, {transform_indices = @transform_1, window_bounds = array<i64: 1, 8, 32>}, {pipeline_mode = #tpu.pipeline_mode<synchronous>, transform_indices = @transform_2, window_bounds = array<i64: 32, 32>}, {pipeline_mode = #tpu.pipeline_mode<synchronous>, transform_indices = @transform_3, window_bounds = array<i64: 1, 32>}, {pipeline_mode = #tpu.pipeline_mode<synchronous>, transform_indices = @transform_4, window_bounds = array<i64: 32, 64>}, {pipeline_mode = #tpu.pipeline_mode<synchronous>, transform_indices = @transform_5, window_bounds = array<i64: 1, 64>}, {pipeline_mode = #tpu.pipeline_mode<synchronous>, transform_indices = @transform_6, window_bounds = array<i64: 32, 32>}, {pipeline_mode = #tpu.pipeline_mode<synchronous>, transform_indices = @transform_7, window_bounds = array<i64: 1, 32>}, {transform_indices = @transform_8, window_bounds = array<i64: 1, 8, 32>}, {transform_indices = @transform_9, window_bounds = array<i64: 1, 4, 8, 8>}]} {
    %c0_i32 = arith.constant 0 : i32
    %0 = arith.cmpi eq, %arg1, %c0_i32 : i32
    %1 = arith.extui %0 : i1 to i32
    %c0_i32_0 = arith.constant 0 : i32
    %2 = arith.cmpi ne, %1, %c0_i32_0 : i32
    scf.if %2 {
      %c0_35 = arith.constant 0 : index
      %c0_36 = arith.constant 0 : index
      %c0_37 = arith.constant 0 : index
      %50 = vector.load %arg3[%c0_35, %c0_36, %c0_37] : memref<1x8x32xf32, #tpu.memory_space<vmem>>, vector<1x8x32xf32>
      %51 = vector.shape_cast %50 : vector<1x8x32xf32> to vector<8x32xf32>
      %c0_38 = arith.constant 0 : index
      %c0_39 = arith.constant 0 : index
      %52 = vector.load %arg6[%c0_38, %c0_39] : memref<32x64xf32, #tpu.memory_space<vmem>>, vector<32x64xf32>
      %cst_40 = arith.constant dense<0.000000e+00> : vector<8x64xf32>
      %53 = tpu.matmul %51, %52, %cst_40 {dimension_numbers = #tpu.dot_dimension_numbers<[1], [0], [0], [1], [0, 0, 1, 1], [], []>} : vector<8x32xf32>, vector<32x64xf32>, vector<8x64xf32> -> vector<8x64xf32>
      %c0_41 = arith.constant 0 : index
      %c0_42 = arith.constant 0 : index
      %54 = vector.load %arg7[%c0_41, %c0_42] : memref<1x64xf32, #tpu.memory_space<vmem>>, vector<1x64xf32>
      %55 = vector.shape_cast %54 : vector<1x64xf32> to vector<64xf32>
      %56 = vector.shape_cast %55 : vector<64xf32> to vector<1x64xf32>
      %57 = vector.broadcast %56 : vector<1x64xf32> to vector<8x64xf32>
      %58 = arith.addf %53, %57 : vector<8x64xf32>
      %c0_43 = arith.constant 0 : index
      %c0_44 = arith.constant 0 : index
      %59 = vector.load %arg13[%c0_43, %c0_44] : memref<8x64xf32, #tpu.memory_space<vmem>>, vector<8x64xf32>
      tpu.vector_store %arg13[%c0_43, %c0_44], %58 {strides = array<i32>} : memref<8x64xf32, #tpu.memory_space<vmem>>, vector<8x64xf32>,
    } else {
    }
    %c0 = arith.constant 0 : index
    %c0_1 = arith.constant 0 : index
    %c0_2 = arith.constant 0 : index
    %3 = vector.load %arg2[%c0, %c0_1, %c0_2] : memref<1x8x32xf32, #tpu.memory_space<vmem>>, vector<1x8x32xf32>
    %4 = vector.shape_cast %3 : vector<1x8x32xf32> to vector<8x32xf32>
    %c0_3 = arith.constant 0 : index
    %c0_4 = arith.constant 0 : index
    %5 = vector.load %arg4[%c0_3, %c0_4] : memref<32x32xf32, #tpu.memory_space<vmem>>, vector<32x32xf32>
    %cst = arith.constant dense<0.000000e+00> : vector<8x32xf32>
    %6 = tpu.matmul %4, %5, %cst {dimension_numbers = #tpu.dot_dimension_numbers<[1], [0], [0], [1], [0, 0, 1, 1], [], []>} : vector<8x32xf32>, vector<32x32xf32>, vector<8x32xf32> -> vector<8x32xf32>
    %c0_5 = arith.constant 0 : index
    %c0_6 = arith.constant 0 : index
    %7 = vector.load %arg5[%c0_5, %c0_6] : memref<1x32xf32, #tpu.memory_space<vmem>>, vector<1x32xf32>
    %8 = vector.shape_cast %7 : vector<1x32xf32> to vector<32xf32>
    %9 = vector.shape_cast %8 : vector<32xf32> to vector<1x32xf32>
    %10 = vector.broadcast %9 : vector<1x32xf32> to vector<8x32xf32>
    %11 = arith.addf %6, %10 : vector<8x32xf32>
    %cst_7 = arith.constant 0.353553385 : f32
    %12 = vector.broadcast %cst_7 : f32 to vector<8x32xf32>
    %13 = arith.mulf %11, %12 : vector<8x32xf32>
    %c0_8 = arith.constant 0 : index
    %c0_9 = arith.constant 0 : index
    %14 = vector.load %arg12[%c0_8, %c0_9] : memref<8x32xf32, #tpu.memory_space<vmem>>, vector<8x32xf32>
    tpu.vector_store %arg12[%c0_8, %c0_9], %13 {strides = array<i32>} : memref<8x32xf32, #tpu.memory_space<vmem>>, vector<8x32xf32>,
    %c0_10 = arith.constant 0 : index
    %c0_11 = arith.constant 0 : index
    %15 = vector.load %arg12[%c0_10, %c0_11] : memref<8x32xf32, #tpu.memory_space<vmem>>, vector<8x32xf32>
    %16 = vector.shape_cast %15 : vector<8x32xf32> to vector<8x4x8xf32>
    %c0_12 = arith.constant 0 : index
    %c0_13 = arith.constant 0 : index
    %17 = vector.load %arg13[%c0_12, %c0_13] : memref<8x64xf32, #tpu.memory_space<vmem>>, vector<8x32xf32>
    %18 = vector.shape_cast %17 : vector<8x32xf32> to vector<8x4x8xf32>
    %c0_14 = arith.constant 0 : index
    %c32 = arith.constant 32 : index
    %19 = vector.load %arg13[%c0_14, %c32] : memref<8x64xf32, #tpu.memory_space<vmem>>, vector<8x32xf32>
    %20 = vector.shape_cast %19 : vector<8x32xf32> to vector<8x4x8xf32>
    "tpu.trace_start"() <{level = 10 : i32, message = "nhd,mhd->hnm"}> : () -> ()
    %cst_15 = arith.constant dense<0.000000e+00> : vector<4x8x8xf32>
    %21 = tpu.matmul %16, %18, %cst_15 {dimension_numbers = #tpu.dot_dimension_numbers<[2], [2], [0], [0], [0, 1, 0, 0, 1, 0], [1], [1]>} : vector<8x4x8xf32>, vector<8x4x8xf32>, vector<4x8x8xf32> -> vector<4x8x8xf32>
    "tpu.trace_stop"() : () -> ()
    %cst_16 = arith.constant dense<0xFF800000> : vector<4x8xf32>
    %22 = vector.multi_reduction <maximumf>, %21, %cst_16 [2] : vector<4x8x8xf32> to vector<4x8xf32>
    %23 = vector.shape_cast %22 : vector<4x8xf32> to vector<4x8x1xf32>
    %24 = vector.broadcast %23 : vector<4x8x1xf32> to vector<4x8x8xf32>
    %25 = arith.subf %21, %24 : vector<4x8x8xf32>
    %26 = math.exp %25 : vector<4x8x8xf32>
    %cst_17 = arith.constant dense<0.000000e+00> : vector<4x8xf32>
    %27 = vector.multi_reduction <add>, %26, %cst_17 [2] : vector<4x8x8xf32> to vector<4x8xf32>
    %28 = vector.shape_cast %27 : vector<4x8xf32> to vector<4x8x1xf32>
    %29 = tpu.reciprocal %28 : vector<4x8x1xf32> -> vector<4x8x1xf32>
    %30 = vector.broadcast %29 : vector<4x8x1xf32> to vector<4x8x8xf32>
    %31 = arith.mulf %26, %30 : vector<4x8x8xf32>
    %c0_18 = arith.constant 0 : index
    %c0_19 = arith.constant 0 : index
    %c0_20 = arith.constant 0 : index
    %c0_21 = arith.constant 0 : index
    %32 = vector.load %arg11[%c0_18, %c0_19, %c0_20, %c0_21] : memref<1x4x8x8xf32, #tpu.memory_space<vmem>>, vector<1x4x8x8xf32>
    %33 = vector.shape_cast %32 : vector<1x4x8x8xf32> to vector<4x8x8xf32>
    %34 = vector.shape_cast %31 : vector<4x8x8xf32> to vector<1x4x8x8xf32>
    tpu.vector_store %arg11[%c0_18, %c0_19, %c0_20, %c0_21], %34 {strides = array<i32>} : memref<1x4x8x8xf32, #tpu.memory_space<vmem>>, vector<1x4x8x8xf32>,
    "tpu.trace_start"() <{level = 10 : i32, message = "hnm,mhd->nhd"}> : () -> ()
    %cst_22 = arith.constant dense<0.000000e+00> : vector<4x8x8xf32>
    %35 = tpu.matmul %20, %31, %cst_22 {dimension_numbers = #tpu.dot_dimension_numbers<[0], [2], [2], [1], [0, 1, 0, 2, 1, 1], [1], [0]>} : vector<8x4x8xf32>, vector<4x8x8xf32>, vector<4x8x8xf32> -> vector<4x8x8xf32>
    %36 = tpu.transpose %35, [2, 0, 1] : vector<4x8x8xf32> -> vector<8x4x8xf32>
    "tpu.trace_stop"() : () -> ()
    %37 = vector.shape_cast %36 : vector<8x4x8xf32> to vector<8x32xf32>
    %c0_23 = arith.constant 0 : index
    %c0_24 = arith.constant 0 : index
    %38 = vector.load %arg14[%c0_23, %c0_24] : memref<8x32xf32, #tpu.memory_space<vmem>>, vector<8x32xf32>
    tpu.vector_store %arg14[%c0_23, %c0_24], %37 {strides = array<i32>} : memref<8x32xf32, #tpu.memory_space<vmem>>, vector<8x32xf32>,
    %c0_25 = arith.constant 0 : index
    %c0_26 = arith.constant 0 : index
    %39 = vector.load %arg14[%c0_25, %c0_26] : memref<8x32xf32, #tpu.memory_space<vmem>>, vector<8x32xf32>
    %c0_27 = arith.constant 0 : index
    %c0_28 = arith.constant 0 : index
    %40 = vector.load %arg8[%c0_27, %c0_28] : memref<32x32xf32, #tpu.memory_space<vmem>>, vector<32x32xf32>
    %cst_29 = arith.constant dense<0.000000e+00> : vector<8x32xf32>
    %41 = tpu.matmul %39, %40, %cst_29 {dimension_numbers = #tpu.dot_dimension_numbers<[1], [0], [0], [1], [0, 0, 1, 1], [], []>} : vector<8x32xf32>, vector<32x32xf32>, vector<8x32xf32> -> vector<8x32xf32>
    %c0_30 = arith.constant 0 : index
    %c0_31 = arith.constant 0 : index
    %42 = vector.load %arg9[%c0_30, %c0_31] : memref<1x32xf32, #tpu.memory_space<vmem>>, vector<1x32xf32>
    %43 = vector.shape_cast %42 : vector<1x32xf32> to vector<32xf32>
    %44 = vector.shape_cast %43 : vector<32xf32> to vector<1x32xf32>
    %45 = vector.broadcast %44 : vector<1x32xf32> to vector<8x32xf32>
    %46 = arith.addf %41, %45 : vector<8x32xf32>
    %c0_32 = arith.constant 0 : index
    %c0_33 = arith.constant 0 : index
    %c0_34 = arith.constant 0 : index
    %47 = vector.load %arg10[%c0_32, %c0_33, %c0_34] : memref<1x8x32xf32, #tpu.memory_space<vmem>>, vector<1x8x32xf32>
    %48 = vector.shape_cast %47 : vector<1x8x32xf32> to vector<8x32xf32>
    %49 = vector.shape_cast %46 : vector<8x32xf32> to vector<1x8x32xf32>
    tpu.vector_store %arg10[%c0_32, %c0_33, %c0_34], %49 {strides = array<i32>} : memref<1x8x32xf32, #tpu.memory_space<vmem>>, vector<1x8x32xf32>,
    return
  }
  func.func @transform_0(%arg0: i32, %arg1: i32) -> (i32, i32, i32) {
    %c0_i32 = arith.constant 0 : i32
    %c0_i32_0 = arith.constant 0 : i32
    return %arg0, %arg1, %c0_i32 : i32, i32, i32
  }
  func.func @transform_1(%arg0: i32, %arg1: i32) -> (i32, i32, i32) {
    %c0_i32 = arith.constant 0 : i32
    %c0_i32_0 = arith.constant 0 : i32
    %c0_i32_1 = arith.constant 0 : i32
    return %arg0, %c0_i32, %c0_i32_0 : i32, i32, i32
  }
  func.func @transform_2(%arg0: i32, %arg1: i32) -> (i32, i32) {
    %c0_i32 = arith.constant 0 : i32
    %c0_i32_0 = arith.constant 0 : i32
    %c0_i32_1 = arith.constant 0 : i32
    return %c0_i32, %c0_i32_0 : i32, i32
  }
  func.func @transform_3(%arg0: i32, %arg1: i32) -> (i32, i32) {
    %c0_i32 = arith.constant 0 : i32
    %c0_i32_0 = arith.constant 0 : i32
    %c0_i32_1 = arith.constant 0 : i32
    return %c0_i32, %c0_i32_0 : i32, i32
  }
  func.func @transform_4(%arg0: i32, %arg1: i32) -> (i32, i32) {
    %c0_i32 = arith.constant 0 : i32
    %c0_i32_0 = arith.constant 0 : i32
    %c0_i32_1 = arith.constant 0 : i32
    return %c0_i32, %c0_i32_0 : i32, i32
  }
  func.func @transform_5(%arg0: i32, %arg1: i32) -> (i32, i32) {
    %c0_i32 = arith.constant 0 : i32
    %c0_i32_0 = arith.constant 0 : i32
    %c0_i32_1 = arith.constant 0 : i32
    return %c0_i32, %c0_i32_0 : i32, i32
  }
  func.func @transform_6(%arg0: i32, %arg1: i32) -> (i32, i32) {
    %c0_i32 = arith.constant 0 : i32
    %c0_i32_0 = arith.constant 0 : i32
    %c0_i32_1 = arith.constant 0 : i32
    return %c0_i32, %c0_i32_0 : i32, i32
  }
  func.func @transform_7(%arg0: i32, %arg1: i32) -> (i32, i32) {
    %c0_i32 = arith.constant 0 : i32
    %c0_i32_0 = arith.constant 0 : i32
    %c0_i32_1 = arith.constant 0 : i32
    return %c0_i32, %c0_i32_0 : i32, i32
  }
  func.func @transform_8(%arg0: i32, %arg1: i32) -> (i32, i32, i32) {
    %c0_i32 = arith.constant 0 : i32
    %c0_i32_0 = arith.constant 0 : i32
    return %arg0, %arg1, %c0_i32 : i32, i32, i32
  }
  func.func @transform_9(%arg0: i32, %arg1: i32) -> (i32, i32, i32, i32) {
    %c0_i32 = arith.constant 0 : i32
    %c0_i32_0 = arith.constant 0 : i32
    %c0_i32_1 = arith.constant 0 : i32
    return %arg0, %c0_i32, %arg1, %c0_i32_0 : i32, i32, i32, i32
  }
}

</mosaic_0001>

<llo_original>
// kernel: tpu_custom_call.1
$region0: #{tpu_custom_call.1}
  #allocation0 [shape = 'u32[]', space=smem, size = 0x4, offset = 0x4, fixed_abs, tag = 'smem constant byte address 0x4 - core index']
  #allocation1 [shape = 'u32[144,128]{1,0:T(1,128)}', space=vmem, size = 0x12000, scoped, tag = 'internal scratch']
  #allocation2 [shape = 'f32[8,32]{1,0:T(8,128)}', space=vmem, size = 0x1000, scoped, tag = 'scratch operand']
  #allocation3 [shape = 'f32[8,64]{1,0:T(8,128)}', space=vmem, size = 0x1000, scoped, tag = 'scratch operand']
  #allocation4 [shape = 'f32[8,32]{1,0:T(8,128)}', space=vmem, size = 0x1000, scoped, tag = 'scratch operand']
  %s0 = inlined_call_operand.hbm [shape: f32[2,8,32], index: 0, kind: input, shape index: {}]
  %s1 = inlined_call_operand.hbm [shape: f32[2,8,32], index: 1, kind: input, shape index: {}]
  %s2 = inlined_call_operand.hbm [shape: f32[32,32], index: 2, kind: input, shape index: {}]
  %s3 = inlined_call_operand.vmem [shape: f32[1,32], index: 3, kind: input, shape index: {}]
  %s4 = inlined_call_operand.hbm [shape: f32[32,64], index: 4, kind: input, shape index: {}]
  %s5 = inlined_call_operand.vmem [shape: f32[1,64], index: 5, kind: input, shape index: {}]
  %s6 = inlined_call_operand.hbm [shape: f32[32,32], index: 6, kind: input, shape index: {}]
  %s7 = inlined_call_operand.vmem [shape: f32[1,32], index: 7, kind: input, shape index: {}]
  %s8 = inlined_call_operand.hbm [shape: f32[2,8,32], index: 8, kind: output, shape index: {0}]
  %s9 = inlined_call_operand.hbm [shape: f32[2,4,8,8], index: 9, kind: output, shape index: {1}]
  %10 = xla_tuple %s8, %s9
  %s11 = sld [smem:[#allocation0]]
  $region97: #{tpu_custom_call.1} parent=0
    _
  %s13 = ssub.s32 1, %s11
  %s14 = scalar_select 0, %s13, %s11
  $region1: #{tpu_custom_call.1} parent=0
    #allocation5 [shape = 'u8[8192]{0}', space=vmem, size = 0x2000, scoped, tag = 'input window, operand 0']
    #allocation6 [shape = 's32[2]{0}', space=sflag, size = 0x8, scoped, tag = 'scoped memory for tpu_custom_call.1']
    #allocation7 [shape = 's32[2]{0}', space=sflag, size = 0x8, scoped, tag = 'scoped memory for tpu_custom_call.1']
    #allocation8 [shape = 'u8[8192]{0}', space=vmem, size = 0x2000, scoped, tag = 'input window, operand 1']
    #allocation9 [shape = 's32[2]{0}', space=sflag, size = 0x8, scoped, tag = 'scoped memory for tpu_custom_call.1']
    #allocation10 [shape = 'u8[16384]{0}', space=vmem, size = 0x4000, scoped, tag = 'input window, operand 2, single buffered']
    #allocation11 [shape = 'u8[16384]{0}', space=vmem, size = 0x4000, scoped, tag = 'input window, operand 4, single buffered']
    #allocation12 [shape = 's32[1]{0}', space=sflag, size = 0x4, scoped, tag = 'scoped memory for tpu_custom_call.1']
    #allocation13 [shape = 'u8[16384]{0}', space=vmem, size = 0x4000, scoped, tag = 'input window, operand 6, single buffered']
    #allocation14 [shape = 'u8[8192]{0}', space=vmem, size = 0x2000, scoped, tag = 'output window, operand 0']
    #allocation15 [shape = 'u8[32768]{0}', space=vmem, size = 0x8000, scoped, tag = 'output window, operand 1']
    #allocation16 [shape = 's32[2]{0}', space=sflag, size = 0x8, scoped, tag = 'scoped memory for tpu_custom_call.1']
    %15 = vsyncpa [#allocation6], 0
    %s16 = scalar_lea.sflag [#allocation6], 1
    %17 = vsyncpa %s16, 0
    %18 = vsyncpa [#allocation9], 0
    %s19 = scalar_lea.sflag [#allocation9], 1
    %20 = vsyncpa %s19, 0
    %21 = vsyncpa [#allocation12], 0
    %22 = vsyncpa [#allocation7], 0
    %s23 = scalar_lea.sflag [#allocation7], 1
    %24 = vsyncpa %s23, 0
    %25 = vsyncpa [#allocation16], 0
    %s26 = scalar_lea.sflag [#allocation16], 1
    %27 = vsyncpa %s26, 0
    loop: start=0, step=1, limit=4
    $region2: #{tpu_custom_call.1} parent=1 // loop_pre_header
      _
    $region3: #{tpu_custom_call.1} parent=1 // loop_header
      %s29 = sphi 0, %s33
      %p30 = scmp.ge.s32.totalorder %s29, 4
      %s36 = sphi 0, %s48
      %s37 = sphi 0, %s44
      %s38 = sphi 0, %s36
      %s39 = sphi 0, %s37
      %s40 = sphi 0, %s38
      %s41 = sphi 0, %s39
      %s53 = sphi 0, %s55
      %s56 = sphi 0, %s53
      %s57 = sphi 0, %s56
      %s73 = sphi 0, %s57
      %s79 = sphi 0, %s81
      %s82 = sphi 0, %s79
      %s83 = sphi 0, %s82
      %s99 = sphi 0, %s83
      %s103 = sphi 0, %s103
      %s105 = sphi 0, %s103
      %s106 = sphi 0, %s105
      %s120 = sphi 0, %s106
      %s124 = sphi 0, %s124
      %s126 = sphi 0, %s124
      %s127 = sphi 0, %s126
      %s141 = sphi 0, %s127
      %s145 = sphi 0, %s145
      %s147 = sphi 0, %s145
      %s148 = sphi 0, %s147
      %s162 = sphi 0, %s148
      %s166 = sphi 0, %s166
      %s168 = sphi 0, %s166
      %s169 = sphi 0, %s168
      %s183 = sphi 0, %s169
      %s187 = sphi 0, %s187
      %s189 = sphi 0, %s187
      %s190 = sphi 0, %s189
      %s204 = sphi 0, %s190
      %s208 = sphi 0, %s208
      %s210 = sphi 0, %s208
      %s211 = sphi 0, %s210
      %s225 = sphi 0, %s211
      %s233 = sphi 0, %s235
      %s236 = sphi 0, %s233
      %s237 = sphi 0, %s236
      %s253 = sphi 0, %s237
      %s261 = sphi 0, %s263
      %s264 = sphi 0, %s261
      %s265 = sphi 0, %s264
      %s281 = sphi 0, %s265
    $region4: #{tpu_custom_call.1} parent=1 // loop_header_branch
      %32 = sbr.rel (%p30) target = $region8
    $region5: #{tpu_custom_call.1} parent=1 // loop_body
      %s34 = ssub.s32 %s29, 1
      %s35 = ssub.s32 %s29, 2
      %s42 = sadd.s32 1, %s37
      %p43 = scmp.ge.s32.totalorder %s42, 1
      %s44 = scalar_select %p43, 0, %s42
      %s45 = sadd.s32 1, %s36
      %s46 = scalar_select %p43, %s45, %s36
      %p47 = scmp.ge.s32.totalorder %s46, 2
      %s48 = scalar_select %p47, 0, %s46
      %s49 = ssub.s32 %s36, %s48
      %s50 = ssub.s32 %s37, %s44
      %s51 = sor.u32 %s49, %s50
      %p52 = scmp.eq.s32.totalorder %s51, 0
      %s54 = sadd.s32 %s53, 1
      %s55 = scalar_select %p52, %s53, %s54
      %p58 = pneg %p52
      %p59 = scmp.eq.s32.totalorder %s29, 1
      %p60 = por %p58, %p59
      %p61 = scmp.ne.s32.totalorder %s53, %s56
      %p62 = scmp.eq.s32.totalorder %s29, 0
      %p63 = por %p61, %p62
      %p64 = scmp.ne.s32.totalorder %s53, %s56
      %p65 = scmp.eq.s32.totalorder %s34, 1
      %p66 = por %p64, %p65
      %p67 = scmp.ne.s32.totalorder %s56, %s57
      %p68 = scmp.eq.s32.totalorder %s34, 0
      %p69 = por %p67, %p68
      %p70 = scmp.ne.s32.totalorder %s56, %s57
      %p71 = scmp.eq.s32.totalorder %s35, 1
      %p72 = por %p70, %p71
      %p74 = scmp.ne.s32.totalorder %s57, %s73
      %p75 = scmp.eq.s32.totalorder %s35, 0
      %p76 = por %p74, %p75
      %s77 = ssub.s32 %s36, %s48
      %p78 = scmp.eq.s32.totalorder %s77, 0
      %s80 = sadd.s32 %s79, 1
      %s81 = scalar_select %p78, %s79, %s80
      %p84 = pneg %p78
      %p85 = scmp.eq.s32.totalorder %s29, 1
      %p86 = por %p84, %p85
      %p87 = scmp.ne.s32.totalorder %s79, %s82
      %p88 = scmp.eq.s32.totalorder %s29, 0
      %p89 = por %p87, %p88
      %p90 = scmp.ne.s32.totalorder %s79, %s82
      %p91 = scmp.eq.s32.totalorder %s34, 1
      %p92 = por %p90, %p91
      %p93 = scmp.ne.s32.totalorder %s82, %s83
      %p94 = scmp.eq.s32.totalorder %s34, 0
      %p95 = por %p93, %p94
      %p96 = scmp.ne.s32.totalorder %s82, %s83
      %p97 = scmp.eq.s32.totalorder %s35, 1
      %p98 = por %p96, %p97
      %p100 = scmp.ne.s32.totalorder %s83, %s99
      %p101 = scmp.eq.s32.totalorder %s35, 0
      %p102 = por %p100, %p101
      %s104 = sadd.s32 %s103, 1
      %p107 = scmp.eq.s32.totalorder %s29, 1
      %p108 = scmp.ne.s32.totalorder %s103, %s105
      %p109 = scmp.eq.s32.totalorder %s29, 0
      %p110 = por %p108, %p109
      %p111 = scmp.ne.s32.totalorder %s103, %s105
      %p112 = scmp.eq.s32.totalorder %s34, 1
      %p113 = por %p111, %p112
      %p114 = scmp.ne.s32.totalorder %s105, %s106
      %p115 = scmp.eq.s32.totalorder %s34, 0
      %p116 = por %p114, %p115
      %p117 = scmp.ne.s32.totalorder %s105, %s106
      %p118 = scmp.eq.s32.totalorder %s35, 1
      %p119 = por %p117, %p118
      %p121 = scmp.ne.s32.totalorder %s106, %s120
      %p122 = scmp.eq.s32.totalorder %s35, 0
      %p123 = por %p121, %p122
      %s125 = sadd.s32 %s124, 1
      %p128 = scmp.eq.s32.totalorder %s29, 1
      %p129 = scmp.ne.s32.totalorder %s124, %s126
      %p130 = scmp.eq.s32.totalorder %s29, 0
      %p131 = por %p129, %p130
      %p132 = scmp.ne.s32.totalorder %s124, %s126
      %p133 = scmp.eq.s32.totalorder %s34, 1
      %p134 = por %p132, %p133
      %p135 = scmp.ne.s32.totalorder %s126, %s127
      %p136 = scmp.eq.s32.totalorder %s34, 0
      %p137 = por %p135, %p136
      %p138 = scmp.ne.s32.totalorder %s126, %s127
      %p139 = scmp.eq.s32.totalorder %s35, 1
      %p140 = por %p138, %p139
      %p142 = scmp.ne.s32.totalorder %s127, %s141
      %p143 = scmp.eq.s32.totalorder %s35, 0
      %p144 = por %p142, %p143
      %s146 = sadd.s32 %s145, 1
      %p149 = scmp.eq.s32.totalorder %s29, 1
      %p150 = scmp.ne.s32.totalorder %s145, %s147
      %p151 = scmp.eq.s32.totalorder %s29, 0
      %p152 = por %p150, %p151
      %p153 = scmp.ne.s32.totalorder %s145, %s147
      %p154 = scmp.eq.s32.totalorder %s34, 1
      %p155 = por %p153, %p154
      %p156 = scmp.ne.s32.totalorder %s147, %s148
      %p157 = scmp.eq.s32.totalorder %s34, 0
      %p158 = por %p156, %p157
      %p159 = scmp.ne.s32.totalorder %s147, %s148
      %p160 = scmp.eq.s32.totalorder %s35, 1
      %p161 = por %p159, %p160
      %p163 = scmp.ne.s32.totalorder %s148, %s162
      %p164 = scmp.eq.s32.totalorder %s35, 0
      %p165 = por %p163, %p164
      %s167 = sadd.s32 %s166, 1
      %p170 = scmp.eq.s32.totalorder %s29, 1
      %p171 = scmp.ne.s32.totalorder %s166, %s168
      %p172 = scmp.eq.s32.totalorder %s29, 0
      %p173 = por %p171, %p172
      %p174 = scmp.ne.s32.totalorder %s166, %s168
      %p175 = scmp.eq.s32.totalorder %s34, 1
      %p176 = por %p174, %p175
      %p177 = scmp.ne.s32.totalorder %s168, %s169
      %p178 = scmp.eq.s32.totalorder %s34, 0
      %p179 = por %p177, %p178
      %p180 = scmp.ne.s32.totalorder %s168, %s169
      %p181 = scmp.eq.s32.totalorder %s35, 1
      %p182 = por %p180, %p181
      %p184 = scmp.ne.s32.totalorder %s169, %s183
      %p185 = scmp.eq.s32.totalorder %s35, 0
      %p186 = por %p184, %p185
      %s188 = sadd.s32 %s187, 1
      %p191 = scmp.eq.s32.totalorder %s29, 1
      %p192 = scmp.ne.s32.totalorder %s187, %s189
      %p193 = scmp.eq.s32.totalorder %s29, 0
      %p194 = por %p192, %p193
      %p195 = scmp.ne.s32.totalorder %s187, %s189
      %p196 = scmp.eq.s32.totalorder %s34, 1
      %p197 = por %p195, %p196
      %p198 = scmp.ne.s32.totalorder %s189, %s190
      %p199 = scmp.eq.s32.totalorder %s34, 0
      %p200 = por %p198, %p199
      %p201 = scmp.ne.s32.totalorder %s189, %s190
      %p202 = scmp.eq.s32.totalorder %s35, 1
      %p203 = por %p201, %p202
      %p205 = scmp.ne.s32.totalorder %s190, %s204
      %p206 = scmp.eq.s32.totalorder %s35, 0
      %p207 = por %p205, %p206
      %s209 = sadd.s32 %s208, 1
      %p212 = scmp.eq.s32.totalorder %s29, 1
      %p213 = scmp.ne.s32.totalorder %s208, %s210
      %p214 = scmp.eq.s32.totalorder %s29, 0
      %p215 = por %p213, %p214
      %p216 = scmp.ne.s32.totalorder %s208, %s210
      %p217 = scmp.eq.s32.totalorder %s34, 1
      %p218 = por %p216, %p217
      %p219 = scmp.ne.s32.totalorder %s210, %s211
      %p220 = scmp.eq.s32.totalorder %s34, 0
      %p221 = por %p219, %p220
      %p222 = scmp.ne.s32.totalorder %s210, %s211
      %p223 = scmp.eq.s32.totalorder %s35, 1
      %p224 = por %p222, %p223
      %p226 = scmp.ne.s32.totalorder %s211, %s225
      %p227 = scmp.eq.s32.totalorder %s35, 0
      %p228 = por %p226, %p227
      %s229 = ssub.s32 %s36, %s48
      %s230 = ssub.s32 %s37, %s44
      %s231 = sor.u32 %s229, %s230
      %p232 = scmp.eq.s32.totalorder %s231, 0
      %s234 = sadd.s32 %s233, 1
      %s235 = scalar_select %p232, %s233, %s234
      %p238 = pneg %p232
      %p239 = scmp.eq.s32.totalorder %s29, 1
      %p240 = por %p238, %p239
      %p241 = scmp.ne.s32.totalorder %s233, %s236
      %p242 = scmp.eq.s32.totalorder %s29, 0
      %p243 = por %p241, %p242
      %p244 = scmp.ne.s32.totalorder %s233, %s236
      %p245 = scmp.eq.s32.totalorder %s34, 1
      %p246 = por %p244, %p245
      %p247 = scmp.ne.s32.totalorder %s236, %s237
      %p248 = scmp.eq.s32.totalorder %s34, 0
      %p249 = por %p247, %p248
      %p250 = scmp.ne.s32.totalorder %s236, %s237
      %p251 = scmp.eq.s32.totalorder %s35, 1
      %p252 = por %p250, %p251
      %p254 = scmp.ne.s32.totalorder %s237, %s253
      %p255 = scmp.eq.s32.totalorder %s35, 0
      %p256 = por %p254, %p255
      %s257 = ssub.s32 %s36, %s48
      %s258 = ssub.s32 %s37, %s44
      %s259 = sor.u32 %s257, %s258
      %p260 = scmp.eq.s32.totalorder %s259, 0
      %s262 = sadd.s32 %s261, 1
      %s263 = scalar_select %p260, %s261, %s262
      %p266 = pneg %p260
      %p267 = scmp.eq.s32.totalorder %s29, 1
      %p268 = por %p266, %p267
      %p269 = scmp.ne.s32.totalorder %s261, %s264
      %p270 = scmp.eq.s32.totalorder %s29, 0
      %p271 = por %p269, %p270
      %p272 = scmp.ne.s32.totalorder %s261, %s264
      %p273 = scmp.eq.s32.totalorder %s34, 1
      %p274 = por %p272, %p273
      %p275 = scmp.ne.s32.totalorder %s264, %s265
      %p276 = scmp.eq.s32.totalorder %s34, 0
      %p277 = por %p275, %p276
      %p278 = scmp.ne.s32.totalorder %s264, %s265
      %p279 = scmp.eq.s32.totalorder %s35, 1
      %p280 = por %p278, %p279
      %p282 = scmp.ne.s32.totalorder %s265, %s281
      %p283 = scmp.eq.s32.totalorder %s35, 0
      %p284 = por %p282, %p283
      %p285 = scmp.le.s32.totalorder 1, %s29
      %p286 = scmp.lt.s32.totalorder %s29, 3
      %p287 = pnand %p285, %p286
      %p288 = pneg %p287
      // Predicated region
      $region9: #{tpu_custom_call.1} parent=5 // pred_check
        _
      $region10: #{tpu_custom_call.1} parent=5 // pred_check_branch
        %290 = sbr.rel (%p287) target = $region12
      $region11: #{tpu_custom_call.1} parent=5 // pred_region
        %s291 = ssub.s32 %s29, 1
        // Predicated region
        $region13: #{tpu_custom_call.1} parent=11 // pred_check
          %p292 = pneg %p116
        $region14: #{tpu_custom_call.1} parent=11 // pred_check_branch
          %294 = sbr.rel (%p292) target = $region16
        $region15: #{tpu_custom_call.1} parent=11 // pred_region
          %s296 = ssub.s32 512, 512
          %297 = vsyncadd [#allocation9], %s296
          %s298 = sshll.u32 [#allocation10], 4
          %s299 = int_to_ptr.vmem [resolvable:$true] %s298
          %304 = dma.hbm_to_vmem [thread:$0]  %s2, 512, %s299, [#allocation9], 128, 128, 8
        $region16: #{tpu_custom_call.1} parent=11 // pred_fallthru
          _
        // Predicated region
        $region17: #{tpu_custom_call.1} parent=11 // pred_check
          %p305 = pneg %p137
        $region18: #{tpu_custom_call.1} parent=11 // pred_check_branch
          %307 = sbr.rel (%p305) target = $region20
        $region19: #{tpu_custom_call.1} parent=11 // pred_region
          _
        $region20: #{tpu_custom_call.1} parent=11 // pred_fallthru
          _
        // Predicated region
        $region21: #{tpu_custom_call.1} parent=11 // pred_check
          %p308 = pneg %p158
        $region22: #{tpu_custom_call.1} parent=11 // pred_check_branch
          %310 = sbr.rel (%p308) target = $region24
        $region23: #{tpu_custom_call.1} parent=11 // pred_region
          %s312 = ssub.s32 512, 512
          %313 = vsyncadd [#allocation12], %s312
          %s314 = sshll.u32 [#allocation11], 4
          %s315 = int_to_ptr.vmem [resolvable:$true] %s314
          %320 = dma.hbm_to_vmem [thread:$0]  %s4, 512, %s315, [#allocation12], 128, 128, 8
        $region24: #{tpu_custom_call.1} parent=11 // pred_fallthru
          _
        // Predicated region
        $region25: #{tpu_custom_call.1} parent=11 // pred_check
          %p321 = pneg %p179
        $region26: #{tpu_custom_call.1} parent=11 // pred_check_branch
          %323 = sbr.rel (%p321) target = $region28
        $region27: #{tpu_custom_call.1} parent=11 // pred_region
          _
        $region28: #{tpu_custom_call.1} parent=11 // pred_fallthru
          _
        // Predicated region
        $region29: #{tpu_custom_call.1} parent=11 // pred_check
          %p324 = pneg %p200
        $region30: #{tpu_custom_call.1} parent=11 // pred_check_branch
          %326 = sbr.rel (%p324) target = $region32
        $region31: #{tpu_custom_call.1} parent=11 // pred_region
          %s328 = ssub.s32 512, 512
          %329 = vsyncadd [#allocation12], %s328
          %s330 = sshll.u32 [#allocation13], 4
          %s331 = int_to_ptr.vmem [resolvable:$true] %s330
          %336 = dma.hbm_to_vmem [thread:$0]  %s6, 512, %s331, [#allocation12], 128, 128, 8
        $region32: #{tpu_custom_call.1} parent=11 // pred_fallthru
          _
        // Predicated region
        $region33: #{tpu_custom_call.1} parent=11 // pred_check
          %p337 = pneg %p221
        $region34: #{tpu_custom_call.1} parent=11 // pred_check_branch
          %339 = sbr.rel (%p337) target = $region36
        $region35: #{tpu_custom_call.1} parent=11 // pred_region
          _
        $region36: #{tpu_custom_call.1} parent=11 // pred_fallthru
          _
      $region12: #{tpu_custom_call.1} parent=5 // pred_fallthru
        _
      %p340 = scmp.lt.s32.totalorder %s29, 2
      // Predicated region
      $region37: #{tpu_custom_call.1} parent=5 // pred_check
        %p341 = pneg %p340
      $region38: #{tpu_custom_call.1} parent=5 // pred_check_branch
        %343 = sbr.rel (%p341) target = $region40
      $region39: #{tpu_custom_call.1} parent=5 // pred_region
        // Predicated region
        $region41: #{tpu_custom_call.1} parent=39 // pred_check
          %p344 = pneg %p63
        $region42: #{tpu_custom_call.1} parent=39 // pred_check_branch
          %346 = sbr.rel (%p344) target = $region44
        $region43: #{tpu_custom_call.1} parent=39 // pred_region
          %s347 = sand.u32 %s53, 1
          %s348 = scalar_lea.sflag [#allocation6], %s347
          %s349 = sand.u32 %s53, 1
          %s350 = smul.addr %s349, 8
          %s351 = scalar_lea.vmem [#allocation5], %s350
          %s353 = ssub.s32 128, 128
          %354 = vsyncadd %s348, %s353
          %s355 = sadd.s32 %s37, %s36
          %s356 = smul.addr %s355, 128
          %s357 = scalar_lea.hbm %s0, %s356
          %s359 = sshll.u32 %s351, 4
          %s360 = int_to_ptr.vmem [resolvable:$true] %s359
          %362 = dma.hbm_to_vmem [thread:$0]  %s357, 128, %s360, %s348
        $region44: #{tpu_custom_call.1} parent=39 // pred_fallthru
          _
        // Predicated region
        $region45: #{tpu_custom_call.1} parent=39 // pred_check
          %p363 = pneg %p89
        $region46: #{tpu_custom_call.1} parent=39 // pred_check_branch
          %365 = sbr.rel (%p363) target = $region48
        $region47: #{tpu_custom_call.1} parent=39 // pred_region
          %s366 = sand.u32 %s29, 1
          %s367 = scalar_lea.sflag [#allocation9], %s366
          %s368 = sand.u32 %s79, 1
          %s369 = smul.addr %s368, 8
          %s370 = scalar_lea.vmem [#allocation8], %s369
          %s372 = ssub.s32 128, 128
          %373 = vsyncadd %s367, %s372
          %s374 = smul.addr %s36, 128
          %s375 = scalar_lea.hbm %s1, %s374
          %s377 = sshll.u32 %s370, 4
          %s378 = int_to_ptr.vmem [resolvable:$true] %s377
          %380 = dma.hbm_to_vmem [thread:$0]  %s375, 128, %s378, %s367
        $region48: #{tpu_custom_call.1} parent=39 // pred_fallthru
          _
      $region40: #{tpu_custom_call.1} parent=5 // pred_fallthru
        _
      %p381 = scmp.le.s32.totalorder 1, %s29
      %p382 = scmp.lt.s32.totalorder %s29, 3
      %p383 = pnand %p381, %p382
      %p384 = pneg %p383
      // Predicated region
      $region49: #{tpu_custom_call.1} parent=5 // pred_check
        _
      $region50: #{tpu_custom_call.1} parent=5 // pred_check_branch
        %386 = sbr.rel (%p383) target = $region52
      $region51: #{tpu_custom_call.1} parent=5 // pred_region
        %s387 = ssub.s32 %s29, 1
        %s388 = sand.u32 %s56, 1
        %s389 = scalar_lea.sflag [#allocation6], %s388
        %s390 = sand.u32 %s56, 1
        %s391 = smul.addr %s390, 8
        %s392 = scalar_lea.vmem [#allocation5], %s391
        // Predicated region
        $region53: #{tpu_custom_call.1} parent=51 // pred_check
          %p393 = pneg %p69
        $region54: #{tpu_custom_call.1} parent=51 // pred_check_branch
          %395 = sbr.rel (%p393) target = $region56
        $region55: #{tpu_custom_call.1} parent=51 // pred_region
          %396 = dma.done %s389, 128
        $region56: #{tpu_custom_call.1} parent=51 // pred_fallthru
          _
        %s397 = sand.u32 %s34, 1
        %s398 = scalar_lea.sflag [#allocation9], %s397
        %s399 = sand.u32 %s82, 1
        %s400 = smul.addr %s399, 8
        %s401 = scalar_lea.vmem [#allocation8], %s400
        // Predicated region
        $region57: #{tpu_custom_call.1} parent=51 // pred_check
          %p402 = pneg %p95
        $region58: #{tpu_custom_call.1} parent=51 // pred_check_branch
          %404 = sbr.rel (%p402) target = $region60
        $region59: #{tpu_custom_call.1} parent=51 // pred_region
          %405 = dma.done %s398, 128
        $region60: #{tpu_custom_call.1} parent=51 // pred_fallthru
          _
        // Predicated region
        $region61: #{tpu_custom_call.1} parent=51 // pred_check
          %p406 = pneg %p116
        $region62: #{tpu_custom_call.1} parent=51 // pred_check_branch
          %408 = sbr.rel (%p406) target = $region64
        $region63: #{tpu_custom_call.1} parent=51 // pred_region
          %409 = dma.done [#allocation9], 512
        $region64: #{tpu_custom_call.1} parent=51 // pred_fallthru
          _
        // Predicated region
        $region65: #{tpu_custom_call.1} parent=51 // pred_check
          %p410 = pneg %p158
        $region66: #{tpu_custom_call.1} parent=51 // pred_check_branch
          %412 = sbr.rel (%p410) target = $region68
        $region67: #{tpu_custom_call.1} parent=51 // pred_region
          %413 = dma.done [#allocation12], 512
        $region68: #{tpu_custom_call.1} parent=51 // pred_fallthru
          _
        // Predicated region
        $region69: #{tpu_custom_call.1} parent=51 // pred_check
          %p414 = pneg %p200
        $region70: #{tpu_custom_call.1} parent=51 // pred_check_branch
          %416 = sbr.rel (%p414) target = $region72
        $region71: #{tpu_custom_call.1} parent=51 // pred_region
          %417 = dma.done [#allocation12], 512
        $region72: #{tpu_custom_call.1} parent=51 // pred_fallthru
          _
        %s418 = sand.u32 %s56, 1
        %s419 = scalar_lea.sflag [#allocation6], %s418
        %s420 = sand.u32 %s56, 1
        %s421 = smul.addr %s420, 8
        %s422 = scalar_lea.vmem [#allocation5], %s421
        %p423 = pneg %p69
        %p424 = pneg %p66
        %s425 = sand.u32 %s34, 1
        %s426 = scalar_lea.sflag [#allocation9], %s425
        %s427 = sand.u32 %s82, 1
        %s428 = smul.addr %s427, 8
        %s429 = scalar_lea.vmem [#allocation8], %s428
        %p430 = pneg %p95
        %p431 = pneg %p92
        %p432 = pneg %p116
        %p433 = pneg %p113
        %p434 = pneg %p137
        %p435 = pneg %p134
        %p436 = pneg %p158
        %p437 = pneg %p155
        %p438 = pneg %p179
        %p439 = pneg %p176
        %p440 = pneg %p200
        %p441 = pneg %p197
        %p442 = pneg %p221
        %p443 = pneg %p218
        %p444 = pneg %p249
        %p445 = pneg %p246
        %s446 = sand.u32 %s236, 1
        %s447 = scalar_lea.sflag [#allocation7], %s446
        %s448 = sand.u32 %s236, 1
        %s449 = smul.addr %s448, 8
        %s450 = scalar_lea.vmem [#allocation14], %s449
        %p451 = pneg %p277
        %p452 = pneg %p274
        %s453 = sand.u32 %s264, 1
        %s454 = scalar_lea.sflag [#allocation16], %s453
        %s455 = sand.u32 %s264, 1
        %s456 = smul.addr %s455, 32
        %s457 = scalar_lea.vmem [#allocation15], %s456
        %p458 = scmp.eq.s32.totalorder %s39, 0
        // Predicated region
        $region73: #{tpu_custom_call.1} parent=51 // pred_check
          %p459 = pneg %p458
        $region74: #{tpu_custom_call.1} parent=51 // pred_check_branch
          %461 = sbr.rel (%p459) target = $region76
        $region75: #{tpu_custom_call.1} parent=51 // pred_region
          %v462 = vld [vmem:[%s401] sm:$0xff]
          %v463 = vld [vmem:[#allocation11] sm:$0xff]
          %v464 = vld [vmem:[#allocation11 + $0x8] sm:$0xff]
          %v465 = vld [vmem:[#allocation11 + $0x10] sm:$0xff]
          %v466 = vld [vmem:[#allocation11 + $0x18] sm:$0xff]
          %v467 = vld [vmem:[%s5] sm:$0x1]
          %v469 = vlaneseq
          %v470 = vshrl.u32 %v469, 7
          %v471 = vsub.s32 0, %v470
          %v472 = vrot.slane %v467, %v471
          %vm474 = vcmask 261120
          %v476 = vsel %vm474, %v462, 0
          %478 = vmatprep.subr.mxu0 0.0
          %479 = vmatpush1.msra.mxu0 %v463
          %480 = vmatprep.subr.mxu0 0.0
          %481 = vmatpush1.msra.mxu0 %v464
          %482 = vmatprep.subr.mxu0 0.0
          %483 = vmatpush1.msra.mxu0 %v465
          %484 = vmatprep.subr.mxu0 0.0
          %485 = vmatpush1.msra.mxu0 %v466
          %486 = vmatprep.subr.mxu0 0.0
          %487 = vmatpush1.msra.mxu0 0.0
          %488 = vmatprep.subr.mxu0 0.0
          %489 = vmatpush1.msra.mxu0 0.0
          %490 = vmatprep.subr.mxu0 0.0
          %491 = vmatpush1.msra.mxu0 0.0
          %492 = vmatprep.subr.mxu0 0.0
          %493 = vmatpush1.msra.mxu0 0.0
          %494 = vmatprep.subr.mxu0 0.0
          %495 = vmatpush1.msra.mxu0 0.0
          %496 = vmatprep.subr.mxu0 0.0
          %497 = vmatpush1.msra.mxu0 0.0
          %498 = vmatprep.subr.mxu0 0.0
          %499 = vmatpush1.msra.mxu0 0.0
          %500 = vmatprep.subr.mxu0 0.0
          %501 = vmatpush1.msra.mxu0 0.0
          %502 = vmatprep.subr.mxu0 0.0
          %503 = vmatpush1.msra.mxu0 0.0
          %504 = vmatprep.subr.mxu0 0.0
          %505 = vmatpush1.msra.mxu0 0.0
          %506 = vmatprep.subr.mxu0 0.0
          %507 = vmatpush1.msra.mxu0 0.0
          %508 = vmatprep.subr.mxu0 0.0
          %509 = vmatpush1.msra.mxu0 0.0
          %510 = vmatprep.subr.mxu0 0.0
          %511 = vmatpush1.msra.mxu0 0.0
          %512 = vmatprep.subr.mxu0 0.0
          %513 = vmatpush1.msra.mxu0 0.0
          %514 = vmatprep.subr.mxu0 0.0
          %515 = vmatpush1.msra.mxu0 0.0
          %516 = vmatprep.subr.mxu0 0.0
          %517 = vmatpush1.msra.mxu0 0.0
          %518 = vmatprep.subr.mxu0 0.0
          %519 = vmatpush1.msra.mxu0 0.0
          %520 = vmatprep.subr.mxu0 0.0
          %521 = vmatpush1.msra.mxu0 0.0
          %522 = vmatprep.subr.mxu0 0.0
          %523 = vmatpush1.msra.mxu0 0.0
          %524 = vmatprep.subr.mxu0 0.0
          %525 = vmatpush1.msra.mxu0 0.0
          %526 = vmatprep.subr.mxu0 0.0
          %527 = vmatpush1.msra.mxu0 0.0
          %528 = vmatprep.subr.mxu0 0.0
          %529 = vmatpush1.msra.mxu0 0.0
          %530 = vmatprep.subr.mxu0 0.0
          %531 = vmatpush1.msra.mxu0 0.0
          %532 = vmatprep.subr.mxu0 0.0
          %533 = vmatpush1.msra.mxu0 0.0
          %534 = vmatprep.subr.mxu0 0.0
          %535 = vmatpush1.msra.mxu0 0.0
          %536 = vmatprep.subr.mxu0 0.0
          %537 = vmatpush1.msra.mxu0 0.0
          %538 = vmatprep.subr.mxu0 0.0
          %539 = vmatpush1.msra.mxu0 0.0
          %540 = vmatprep.subr.mxu0 0.0
          %541 = vmatpush1.msra.mxu0 0.0
          %542 = vmatprep.mubr.f32.mxu0 0.0
          %543 = vmatmul.mubr.f32.gmra.mrb[0].mxu0 %v476
          %v544 = vpop.f32.mrb[0].mxu0
          %v545 = vadd.f32 %v472, %v544
          %v546 = vpop.f32.mrb[0].mxu0
          %547 = vdwg.mxu0
          %vm548 = vcmask 523264
          %549 = vst.msk [vmem:[#allocation3] sm:$0xff] %vm548, %v545
        $region76: #{tpu_custom_call.1} parent=51 // pred_fallthru
          _
        %v550 = vld [vmem:[%s392] sm:$0xff]
        %v551 = vld [vmem:[#allocation10] sm:$0xff]
        %v552 = vld [vmem:[#allocation10 + $0x8] sm:$0xff]
        %v553 = vld [vmem:[#allocation10 + $0x10] sm:$0xff]
        %v554 = vld [vmem:[#allocation10 + $0x18] sm:$0xff]
        %v555 = vld [vmem:[%s3] sm:$0x1]
        %v557 = vlaneseq
        %v558 = vshrl.u32 %v557, 7
        %v559 = vsub.s32 0, %v558
        %v560 = vrot.slane %v555, %v559
        %vm562 = vcmask 261120
        %v564 = vsel %vm562, %v550, 0
        %566 = vmatprep.subr.mxu0 0.0
        %567 = vmatpush1.msra.mxu0 %v551
        %568 = vmatprep.subr.mxu0 0.0
        %569 = vmatpush1.msra.mxu0 %v552
        %570 = vmatprep.subr.mxu0 0.0
        %571 = vmatpush1.msra.mxu0 %v553
        %572 = vmatprep.subr.mxu0 0.0
        %573 = vmatpush1.msra.mxu0 %v554
        %574 = vmatprep.subr.mxu0 0.0
        %575 = vmatpush1.msra.mxu0 0.0
        %576 = vmatprep.subr.mxu0 0.0
        %577 = vmatpush1.msra.mxu0 0.0
        %578 = vmatprep.subr.mxu0 0.0
        %579 = vmatpush1.msra.mxu0 0.0
        %580 = vmatprep.subr.mxu0 0.0
        %581 = vmatpush1.msra.mxu0 0.0
        %582 = vmatprep.subr.mxu0 0.0
        %583 = vmatpush1.msra.mxu0 0.0
        %584 = vmatprep.subr.mxu0 0.0
        %585 = vmatpush1.msra.mxu0 0.0
        %586 = vmatprep.subr.mxu0 0.0
        %587 = vmatpush1.msra.mxu0 0.0
        %588 = vmatprep.subr.mxu0 0.0
        %589 = vmatpush1.msra.mxu0 0.0
        %590 = vmatprep.subr.mxu0 0.0
        %591 = vmatpush1.msra.mxu0 0.0
        %592 = vmatprep.subr.mxu0 0.0
        %593 = vmatpush1.msra.mxu0 0.0
        %594 = vmatprep.subr.mxu0 0.0
        %595 = vmatpush1.msra.mxu0 0.0
        %596 = vmatprep.subr.mxu0 0.0
        %597 = vmatpush1.msra.mxu0 0.0
        %598 = vmatprep.subr.mxu0 0.0
        %599 = vmatpush1.msra.mxu0 0.0
        %600 = vmatprep.subr.mxu0 0.0
        %601 = vmatpush1.msra.mxu0 0.0
        %602 = vmatprep.subr.mxu0 0.0
        %603 = vmatpush1.msra.mxu0 0.0
        %604 = vmatprep.subr.mxu0 0.0
        %605 = vmatpush1.msra.mxu0 0.0
        %606 = vmatprep.subr.mxu0 0.0
        %607 = vmatpush1.msra.mxu0 0.0
        %608 = vmatprep.subr.mxu0 0.0
        %609 = vmatpush1.msra.mxu0 0.0
        %610 = vmatprep.subr.mxu0 0.0
        %611 = vmatpush1.msra.mxu0 0.0
        %612 = vmatprep.subr.mxu0 0.0
        %613 = vmatpush1.msra.mxu0 0.0
        %614 = vmatprep.subr.mxu0 0.0
        %615 = vmatpush1.msra.mxu0 0.0
        %616 = vmatprep.subr.mxu0 0.0
        %617 = vmatpush1.msra.mxu0 0.0
        %618 = vmatprep.subr.mxu0 0.0
        %619 = vmatpush1.msra.mxu0 0.0
        %620 = vmatprep.subr.mxu0 0.0
        %621 = vmatpush1.msra.mxu0 0.0
        %622 = vmatprep.subr.mxu0 0.0
        %623 = vmatpush1.msra.mxu0 0.0
        %624 = vmatprep.subr.mxu0 0.0
        %625 = vmatpush1.msra.mxu0 0.0
        %626 = vmatprep.subr.mxu0 0.0
        %627 = vmatpush1.msra.mxu0 0.0
        %628 = vmatprep.subr.mxu0 0.0
        %629 = vmatpush1.msra.mxu0 0.0
        %630 = vmatprep.mubr.f32.mxu0 0.0
        %631 = vmatmul.mubr.f32.gmra.mrb[0].mxu0 %v564
        %v632 = vpop.f32.mrb[0].mxu0
        %v633 = vadd.f32 %v560, %v632
        %v634 = vpop.f32.mrb[0].mxu0
        %635 = vdwg.mxu0
        %v636 = vmul.f32 %v633, 0.35355338
        %637 = vst.msk [vmem:[#allocation2] sm:$0xff] %vm562, %v636
        %v638 = vld [vmem:[#allocation2] sm:$0xff]
        %640 = vrot.lane.b32.xlu0 %v638, 120
        %v641 = vpop.permute.xlu0 %640
        %642 = vrot.lane.b32.xlu0 %v638, 112
        %v643 = vpop.permute.xlu0 %642
        %644 = vrot.lane.b32.xlu0 %v638, 104
        %v645 = vpop.permute.xlu0 %644
        %v646 = vld [vmem:[#allocation3] sm:$0xff]
        %648 = vrot.lane.b32.xlu0 %v646, 120
        %v649 = vpop.permute.xlu0 %648
        %651 = vrot.lane.b32.xlu0 %v646, 112
        %v652 = vpop.permute.xlu0 %651
        %654 = vrot.lane.b32.xlu0 %v646, 104
        %v655 = vpop.permute.xlu0 %654
        %657 = vxpose.xlu0.b32.start [1/16] %v646, 128
        %658 = vxpose.xlu0.b32.cont [2/16] 0.0, 128
        %659 = vxpose.xlu0.b32.cont [3/16] 0.0, 128
        %660 = vxpose.xlu0.b32.cont [4/16] 0.0, 128
        %661 = vxpose.xlu0.b32.cont [5/16] 0.0, 128
        %662 = vxpose.xlu0.b32.cont [6/16] 0.0, 128
        %663 = vxpose.xlu0.b32.cont [7/16] 0.0, 128
        %664 = vxpose.xlu0.b32.cont [8/16] 0.0, 128
        %665 = vxpose.xlu0.b32.cont [9/16] 0.0, 128
        %666 = vxpose.xlu0.b32.cont [10/16] 0.0, 128
        %667 = vxpose.xlu0.b32.cont [11/16] 0.0, 128
        %668 = vxpose.xlu0.b32.cont [12/16] 0.0, 128
        %669 = vxpose.xlu0.b32.cont [13/16] 0.0, 128
        %670 = vxpose.xlu0.b32.cont [14/16] 0.0, 128
        %671 = vxpose.xlu0.b32.cont [15/16] 0.0, 128
        %672 = vxpose.xlu0.b32.end [16/16] 0.0, 128
        %v673 = vpop.trf.xlu0
        %v674 = vpop.trf.xlu0
        %v675 = vpop.trf.xlu0
        %v676 = vpop.trf.xlu0
        %v677 = vpop.trf.xlu0
        %v678 = vpop.trf.xlu0
        %v679 = vpop.trf.xlu0
        %v680 = vpop.trf.xlu0
        %v681 = vpop.trf.xlu0
        %v682 = vpop.trf.xlu0
        %v683 = vpop.trf.xlu0
        %v684 = vpop.trf.xlu0
        %v685 = vpop.trf.xlu0
        %v686 = vpop.trf.xlu0
        %v687 = vpop.trf.xlu0
        %v688 = vpop.trf.xlu0
        %689 = vxpose.xlu0.b32.start [1/16] %v649, 128
        %690 = vxpose.xlu0.b32.cont [2/16] 0.0, 128
        %691 = vxpose.xlu0.b32.cont [3/16] 0.0, 128
        %692 = vxpose.xlu0.b32.cont [4/16] 0.0, 128
        %693 = vxpose.xlu0.b32.cont [5/16] 0.0, 128
        %694 = vxpose.xlu0.b32.cont [6/16] 0.0, 128
        %695 = vxpose.xlu0.b32.cont [7/16] 0.0, 128
        %696 = vxpose.xlu0.b32.cont [8/16] 0.0, 128
        %697 = vxpose.xlu0.b32.cont [9/16] 0.0, 128
        %698 = vxpose.xlu0.b32.cont [10/16] 0.0, 128
        %699 = vxpose.xlu0.b32.cont [11/16] 0.0, 128
        %700 = vxpose.xlu0.b32.cont [12/16] 0.0, 128
        %701 = vxpose.xlu0.b32.cont [13/16] 0.0, 128
        %702 = vxpose.xlu0.b32.cont [14/16] 0.0, 128
        %703 = vxpose.xlu0.b32.cont [15/16] 0.0, 128
        %704 = vxpose.xlu0.b32.end [16/16] 0.0, 128
        %v705 = vpop.trf.xlu0
        %v706 = vpop.trf.xlu0
        %v707 = vpop.trf.xlu0
        %v708 = vpop.trf.xlu0
        %v709 = vpop.trf.xlu0
        %v710 = vpop.trf.xlu0
        %v711 = vpop.trf.xlu0
        %v712 = vpop.trf.xlu0
        %v713 = vpop.trf.xlu0
        %v714 = vpop.trf.xlu0
        %v715 = vpop.trf.xlu0
        %v716 = vpop.trf.xlu0
        %v717 = vpop.trf.xlu0
        %v718 = vpop.trf.xlu0
        %v719 = vpop.trf.xlu0
        %v720 = vpop.trf.xlu0
        %721 = vxpose.xlu0.b32.start [1/16] %v652, 128
        %722 = vxpose.xlu0.b32.cont [2/16] 0.0, 128
        %723 = vxpose.xlu0.b32.cont [3/16] 0.0, 128
        %724 = vxpose.xlu0.b32.cont [4/16] 0.0, 128
        %725 = vxpose.xlu0.b32.cont [5/16] 0.0, 128
        %726 = vxpose.xlu0.b32.cont [6/16] 0.0, 128
        %727 = vxpose.xlu0.b32.cont [7/16] 0.0, 128
        %728 = vxpose.xlu0.b32.cont [8/16] 0.0, 128
        %729 = vxpose.xlu0.b32.cont [9/16] 0.0, 128
        %730 = vxpose.xlu0.b32.cont [10/16] 0.0, 128
        %731 = vxpose.xlu0.b32.cont [11/16] 0.0, 128
        %732 = vxpose.xlu0.b32.cont [12/16] 0.0, 128
        %733 = vxpose.xlu0.b32.cont [13/16] 0.0, 128
        %734 = vxpose.xlu0.b32.cont [14/16] 0.0, 128
        %735 = vxpose.xlu0.b32.cont [15/16] 0.0, 128
        %736 = vxpose.xlu0.b32.end [16/16] 0.0, 128
        %v737 = vpop.trf.xlu0
        %v738 = vpop.trf.xlu0
        %v739 = vpop.trf.xlu0
        %v740 = vpop.trf.xlu0
        %v741 = vpop.trf.xlu0
        %v742 = vpop.trf.xlu0
        %v743 = vpop.trf.xlu0
        %v744 = vpop.trf.xlu0
        %v745 = vpop.trf.xlu0
        %v746 = vpop.trf.xlu0
        %v747 = vpop.trf.xlu0
        %v748 = vpop.trf.xlu0
        %v749 = vpop.trf.xlu0
        %v750 = vpop.trf.xlu0
        %v751 = vpop.trf.xlu0
        %v752 = vpop.trf.xlu0
        %753 = vxpose.xlu0.b32.start [1/16] %v655, 128
        %754 = vxpose.xlu0.b32.cont [2/16] 0.0, 128
        %755 = vxpose.xlu0.b32.cont [3/16] 0.0, 128
        %756 = vxpose.xlu0.b32.cont [4/16] 0.0, 128
        %757 = vxpose.xlu0.b32.cont [5/16] 0.0, 128
        %758 = vxpose.xlu0.b32.cont [6/16] 0.0, 128
        %759 = vxpose.xlu0.b32.cont [7/16] 0.0, 128
        %760 = vxpose.xlu0.b32.cont [8/16] 0.0, 128
        %761 = vxpose.xlu0.b32.cont [9/16] 0.0, 128
        %762 = vxpose.xlu0.b32.cont [10/16] 0.0, 128
        %763 = vxpose.xlu0.b32.cont [11/16] 0.0, 128
        %764 = vxpose.xlu0.b32.cont [12/16] 0.0, 128
        %765 = vxpose.xlu0.b32.cont [13/16] 0.0, 128
        %766 = vxpose.xlu0.b32.cont [14/16] 0.0, 128
        %767 = vxpose.xlu0.b32.cont [15/16] 0.0, 128
        %768 = vxpose.xlu0.b32.end [16/16] 0.0, 128
        %v769 = vpop.trf.xlu0
        %v770 = vpop.trf.xlu0
        %v771 = vpop.trf.xlu0
        %v772 = vpop.trf.xlu0
        %v773 = vpop.trf.xlu0
        %v774 = vpop.trf.xlu0
        %v775 = vpop.trf.xlu0
        %v776 = vpop.trf.xlu0
        %v777 = vpop.trf.xlu0
        %v778 = vpop.trf.xlu0
        %v779 = vpop.trf.xlu0
        %v780 = vpop.trf.xlu0
        %v781 = vpop.trf.xlu0
        %v782 = vpop.trf.xlu0
        %v783 = vpop.trf.xlu0
        %v784 = vpop.trf.xlu0
        %vm785 = vcmask 64512
        %v786 = vsel %vm785, %v638, 0
        %788 = vmatprep.subr.mxu0 0.0
        %789 = vmatpush1.msra.mxu0 %v673
        %790 = vmatprep.subr.mxu0 0.0
        %791 = vmatpush1.msra.mxu0 0.0
        %792 = vmatprep.subr.mxu0 0.0
        %793 = vmatpush1.msra.mxu0 0.0
        %794 = vmatprep.subr.mxu0 0.0
        %795 = vmatpush1.msra.mxu0 0.0
        %796 = vmatprep.subr.mxu0 0.0
        %797 = vmatpush1.msra.mxu0 0.0
        %798 = vmatprep.subr.mxu0 0.0
        %799 = vmatpush1.msra.mxu0 0.0
        %800 = vmatprep.subr.mxu0 0.0
        %801 = vmatpush1.msra.mxu0 0.0
        %802 = vmatprep.subr.mxu0 0.0
        %803 = vmatpush1.msra.mxu0 0.0
        %804 = vmatprep.subr.mxu0 0.0
        %805 = vmatpush1.msra.mxu0 0.0
        %806 = vmatprep.subr.mxu0 0.0
        %807 = vmatpush1.msra.mxu0 0.0
        %808 = vmatprep.subr.mxu0 0.0
        %809 = vmatpush1.msra.mxu0 0.0
        %810 = vmatprep.subr.mxu0 0.0
        %811 = vmatpush1.msra.mxu0 0.0
        %812 = vmatprep.subr.mxu0 0.0
        %813 = vmatpush1.msra.mxu0 0.0
        %814 = vmatprep.subr.mxu0 0.0
        %815 = vmatpush1.msra.mxu0 0.0
        %816 = vmatprep.subr.mxu0 0.0
        %817 = vmatpush1.msra.mxu0 0.0
        %818 = vmatprep.subr.mxu0 0.0
        %819 = vmatpush1.msra.mxu0 0.0
        %820 = vmatprep.subr.mxu0 0.0
        %821 = vmatpush1.msra.mxu0 0.0
        %822 = vmatprep.subr.mxu0 0.0
        %823 = vmatpush1.msra.mxu0 0.0
        %824 = vmatprep.subr.mxu0 0.0
        %825 = vmatpush1.msra.mxu0 0.0
        %826 = vmatprep.subr.mxu0 0.0
        %827 = vmatpush1.msra.mxu0 0.0
        %828 = vmatprep.subr.mxu0 0.0
        %829 = vmatpush1.msra.mxu0 0.0
        %830 = vmatprep.subr.mxu0 0.0
        %831 = vmatpush1.msra.mxu0 0.0
        %832 = vmatprep.subr.mxu0 0.0
        %833 = vmatpush1.msra.mxu0 0.0
        %834 = vmatprep.subr.mxu0 0.0
        %835 = vmatpush1.msra.mxu0 0.0
        %836 = vmatprep.subr.mxu0 0.0
        %837 = vmatpush1.msra.mxu0 0.0
        %838 = vmatprep.subr.mxu0 0.0
        %839 = vmatpush1.msra.mxu0 0.0
        %840 = vmatprep.subr.mxu0 0.0
        %841 = vmatpush1.msra.mxu0 0.0
        %842 = vmatprep.subr.mxu0 0.0
        %843 = vmatpush1.msra.mxu0 0.0
        %844 = vmatprep.subr.mxu0 0.0
        %845 = vmatpush1.msra.mxu0 0.0
        %846 = vmatprep.subr.mxu0 0.0
        %847 = vmatpush1.msra.mxu0 0.0
        %848 = vmatprep.subr.mxu0 0.0
        %849 = vmatpush1.msra.mxu0 0.0
        %850 = vmatprep.subr.mxu0 0.0
        %851 = vmatpush1.msra.mxu0 0.0
        %852 = vmatprep.mubr.f32.mxu0 0.0
        %853 = vmatmul.mubr.f32.gmra.mrb[0].mxu0 %v786
        %v854 = vpop.f32.mrb[0].mxu0
        %v855 = vadd.f32 0.0, %v854
        %v856 = vpop.f32.mrb[0].mxu0
        %857 = vdwg.mxu0
        %v858 = vsel %vm785, %v641, 0
        %860 = vmatprep.subr.mxu0 0.0
        %861 = vmatpush1.msra.mxu0 %v705
        %862 = vmatprep.subr.mxu0 0.0
        %863 = vmatpush1.msra.mxu0 0.0
        %864 = vmatprep.subr.mxu0 0.0
        %865 = vmatpush1.msra.mxu0 0.0
        %866 = vmatprep.subr.mxu0 0.0
        %867 = vmatpush1.msra.mxu0 0.0
        %868 = vmatprep.subr.mxu0 0.0
        %869 = vmatpush1.msra.mxu0 0.0
        %870 = vmatprep.subr.mxu0 0.0
        %871 = vmatpush1.msra.mxu0 0.0
        %872 = vmatprep.subr.mxu0 0.0
        %873 = vmatpush1.msra.mxu0 0.0
        %874 = vmatprep.subr.mxu0 0.0
        %875 = vmatpush1.msra.mxu0 0.0
        %876 = vmatprep.subr.mxu0 0.0
        %877 = vmatpush1.msra.mxu0 0.0
        %878 = vmatprep.subr.mxu0 0.0
        %879 = vmatpush1.msra.mxu0 0.0
        %880 = vmatprep.subr.mxu0 0.0
        %881 = vmatpush1.msra.mxu0 0.0
        %882 = vmatprep.subr.mxu0 0.0
        %883 = vmatpush1.msra.mxu0 0.0
        %884 = vmatprep.subr.mxu0 0.0
        %885 = vmatpush1.msra.mxu0 0.0
        %886 = vmatprep.subr.mxu0 0.0
        %887 = vmatpush1.msra.mxu0 0.0
        %888 = vmatprep.subr.mxu0 0.0
        %889 = vmatpush1.msra.mxu0 0.0
        %890 = vmatprep.subr.mxu0 0.0
        %891 = vmatpush1.msra.mxu0 0.0
        %892 = vmatprep.subr.mxu0 0.0
        %893 = vmatpush1.msra.mxu0 0.0
        %894 = vmatprep.subr.mxu0 0.0
        %895 = vmatpush1.msra.mxu0 0.0
        %896 = vmatprep.subr.mxu0 0.0
        %897 = vmatpush1.msra.mxu0 0.0
        %898 = vmatprep.subr.mxu0 0.0
        %899 = vmatpush1.msra.mxu0 0.0
        %900 = vmatprep.subr.mxu0 0.0
        %901 = vmatpush1.msra.mxu0 0.0
        %902 = vmatprep.subr.mxu0 0.0
        %903 = vmatpush1.msra.mxu0 0.0
        %904 = vmatprep.subr.mxu0 0.0
        %905 = vmatpush1.msra.mxu0 0.0
        %906 = vmatprep.subr.mxu0 0.0
        %907 = vmatpush1.msra.mxu0 0.0
        %908 = vmatprep.subr.mxu0 0.0
        %909 = vmatpush1.msra.mxu0 0.0
        %910 = vmatprep.subr.mxu0 0.0
        %911 = vmatpush1.msra.mxu0 0.0
        %912 = vmatprep.subr.mxu0 0.0
        %913 = vmatpush1.msra.mxu0 0.0
        %914 = vmatprep.subr.mxu0 0.0
        %915 = vmatpush1.msra.mxu0 0.0
        %916 = vmatprep.subr.mxu0 0.0
        %917 = vmatpush1.msra.mxu0 0.0
        %918 = vmatprep.subr.mxu0 0.0
        %919 = vmatpush1.msra.mxu0 0.0
        %920 = vmatprep.subr.mxu0 0.0
        %921 = vmatpush1.msra.mxu0 0.0
        %922 = vmatprep.subr.mxu0 0.0
        %923 = vmatpush1.msra.mxu0 0.0
        %924 = vmatprep.mubr.f32.mxu0 0.0
        %925 = vmatmul.mubr.f32.gmra.mrb[0].mxu0 %v858
        %v926 = vpop.f32.mrb[0].mxu0
        %v927 = vadd.f32 0.0, %v926
        %v928 = vpop.f32.mrb[0].mxu0
        %929 = vdwg.mxu0
        %v930 = vsel %vm785, %v643, 0
        %932 = vmatprep.subr.mxu0 0.0
        %933 = vmatpush1.msra.mxu0 %v737
        %934 = vmatprep.subr.mxu0 0.0
        %935 = vmatpush1.msra.mxu0 0.0
        %936 = vmatprep.subr.mxu0 0.0
        %937 = vmatpush1.msra.mxu0 0.0
        %938 = vmatprep.subr.mxu0 0.0
        %939 = vmatpush1.msra.mxu0 0.0
        %940 = vmatprep.subr.mxu0 0.0
        %941 = vmatpush1.msra.mxu0 0.0
        %942 = vmatprep.subr.mxu0 0.0
        %943 = vmatpush1.msra.mxu0 0.0
        %944 = vmatprep.subr.mxu0 0.0
        %945 = vmatpush1.msra.mxu0 0.0
        %946 = vmatprep.subr.mxu0 0.0
        %947 = vmatpush1.msra.mxu0 0.0
        %948 = vmatprep.subr.mxu0 0.0
        %949 = vmatpush1.msra.mxu0 0.0
        %950 = vmatprep.subr.mxu0 0.0
        %951 = vmatpush1.msra.mxu0 0.0
        %952 = vmatprep.subr.mxu0 0.0
        %953 = vmatpush1.msra.mxu0 0.0
        %954 = vmatprep.subr.mxu0 0.0
        %955 = vmatpush1.msra.mxu0 0.0
        %956 = vmatprep.subr.mxu0 0.0
        %957 = vmatpush1.msra.mxu0 0.0
        %958 = vmatprep.subr.mxu0 0.0
        %959 = vmatpush1.msra.mxu0 0.0
        %960 = vmatprep.subr.mxu0 0.0
        %961 = vmatpush1.msra.mxu0 0.0
        %962 = vmatprep.subr.mxu0 0.0
        %963 = vmatpush1.msra.mxu0 0.0
        %964 = vmatprep.subr.mxu0 0.0
        %965 = vmatpush1.msra.mxu0 0.0
        %966 = vmatprep.subr.mxu0 0.0
        %967 = vmatpush1.msra.mxu0 0.0
        %968 = vmatprep.subr.mxu0 0.0
        %969 = vmatpush1.msra.mxu0 0.0
        %970 = vmatprep.subr.mxu0 0.0
        %971 = vmatpush1.msra.mxu0 0.0
        %972 = vmatprep.subr.mxu0 0.0
        %973 = vmatpush1.msra.mxu0 0.0
        %974 = vmatprep.subr.mxu0 0.0
        %975 = vmatpush1.msra.mxu0 0.0
        %976 = vmatprep.subr.mxu0 0.0
        %977 = vmatpush1.msra.mxu0 0.0
        %978 = vmatprep.subr.mxu0 0.0
        %979 = vmatpush1.msra.mxu0 0.0
        %980 = vmatprep.subr.mxu0 0.0
        %981 = vmatpush1.msra.mxu0 0.0
        %982 = vmatprep.subr.mxu0 0.0
        %983 = vmatpush1.msra.mxu0 0.0
        %984 = vmatprep.subr.mxu0 0.0
        %985 = vmatpush1.msra.mxu0 0.0
        %986 = vmatprep.subr.mxu0 0.0
        %987 = vmatpush1.msra.mxu0 0.0
        %988 = vmatprep.subr.mxu0 0.0
        %989 = vmatpush1.msra.mxu0 0.0
        %990 = vmatprep.subr.mxu0 0.0
        %991 = vmatpush1.msra.mxu0 0.0
        %992 = vmatprep.subr.mxu0 0.0
        %993 = vmatpush1.msra.mxu0 0.0
        %994 = vmatprep.subr.mxu0 0.0
        %995 = vmatpush1.msra.mxu0 0.0
        %996 = vmatprep.mubr.f32.mxu0 0.0
        %997 = vmatmul.mubr.f32.gmra.mrb[0].mxu0 %v930
        %v998 = vpop.f32.mrb[0].mxu0
        %v999 = vadd.f32 0.0, %v998
        %v1000 = vpop.f32.mrb[0].mxu0
        %1001 = vdwg.mxu0
        %v1002 = vsel %vm785, %v645, 0
        %1004 = vmatprep.subr.mxu0 0.0
        %1005 = vmatpush1.msra.mxu0 %v769
        %1006 = vmatprep.subr.mxu0 0.0
        %1007 = vmatpush1.msra.mxu0 0.0
        %1008 = vmatprep.subr.mxu0 0.0
        %1009 = vmatpush1.msra.mxu0 0.0
        %1010 = vmatprep.subr.mxu0 0.0
        %1011 = vmatpush1.msra.mxu0 0.0
        %1012 = vmatprep.subr.mxu0 0.0
        %1013 = vmatpush1.msra.mxu0 0.0
        %1014 = vmatprep.subr.mxu0 0.0
        %1015 = vmatpush1.msra.mxu0 0.0
        %1016 = vmatprep.subr.mxu0 0.0
        %1017 = vmatpush1.msra.mxu0 0.0
        %1018 = vmatprep.subr.mxu0 0.0
        %1019 = vmatpush1.msra.mxu0 0.0
        %1020 = vmatprep.subr.mxu0 0.0
        %1021 = vmatpush1.msra.mxu0 0.0
        %1022 = vmatprep.subr.mxu0 0.0
        %1023 = vmatpush1.msra.mxu0 0.0
        %1024 = vmatprep.subr.mxu0 0.0
        %1025 = vmatpush1.msra.mxu0 0.0
        %1026 = vmatprep.subr.mxu0 0.0
        %1027 = vmatpush1.msra.mxu0 0.0
        %1028 = vmatprep.subr.mxu0 0.0
        %1029 = vmatpush1.msra.mxu0 0.0
        %1030 = vmatprep.subr.mxu0 0.0
        %1031 = vmatpush1.msra.mxu0 0.0
        %1032 = vmatprep.subr.mxu0 0.0
        %1033 = vmatpush1.msra.mxu0 0.0
        %1034 = vmatprep.subr.mxu0 0.0
        %1035 = vmatpush1.msra.mxu0 0.0
        %1036 = vmatprep.subr.mxu0 0.0
        %1037 = vmatpush1.msra.mxu0 0.0
        %1038 = vmatprep.subr.mxu0 0.0
        %1039 = vmatpush1.msra.mxu0 0.0
        %1040 = vmatprep.subr.mxu0 0.0
        %1041 = vmatpush1.msra.mxu0 0.0
        %1042 = vmatprep.subr.mxu0 0.0
        %1043 = vmatpush1.msra.mxu0 0.0
        %1044 = vmatprep.subr.mxu0 0.0
        %1045 = vmatpush1.msra.mxu0 0.0
        %1046 = vmatprep.subr.mxu0 0.0
        %1047 = vmatpush1.msra.mxu0 0.0
        %1048 = vmatprep.subr.mxu0 0.0
        %1049 = vmatpush1.msra.mxu0 0.0
        %1050 = vmatprep.subr.mxu0 0.0
        %1051 = vmatpush1.msra.mxu0 0.0
        %1052 = vmatprep.subr.mxu0 0.0
        %1053 = vmatpush1.msra.mxu0 0.0
        %1054 = vmatprep.subr.mxu0 0.0
        %1055 = vmatpush1.msra.mxu0 0.0
        %1056 = vmatprep.subr.mxu0 0.0
        %1057 = vmatpush1.msra.mxu0 0.0
        %1058 = vmatprep.subr.mxu0 0.0
        %1059 = vmatpush1.msra.mxu0 0.0
        %1060 = vmatprep.subr.mxu0 0.0
        %1061 = vmatpush1.msra.mxu0 0.0
        %1062 = vmatprep.subr.mxu0 0.0
        %1063 = vmatpush1.msra.mxu0 0.0
        %1064 = vmatprep.subr.mxu0 0.0
        %1065 = vmatpush1.msra.mxu0 0.0
        %1066 = vmatprep.subr.mxu0 0.0
        %1067 = vmatpush1.msra.mxu0 0.0
        %1068 = vmatprep.mubr.f32.mxu0 0.0
        %1069 = vmatmul.mubr.f32.gmra.mrb[0].mxu0 %v1002
        %v1070 = vpop.f32.mrb[0].mxu0
        %v1071 = vadd.f32 0.0, %v1070
        %v1072 = vpop.f32.mrb[0].mxu0
        %1073 = vdwg.mxu0
        %v1074 = vsel %vm785, %v855, -inf
        %1075 = vmax.xlane.f32.xlu0 %v1074
        %v1076 = vpop.xlane.xlu0 %1075
        %v1077 = vsel %vm785, %v927, -inf
        %1078 = vmax.xlane.f32.xlu0 %v1077
        %v1079 = vpop.xlane.xlu0 %1078
        %v1080 = vsel %vm785, %v999, -inf
        %1081 = vmax.xlane.f32.xlu0 %v1080
        %v1082 = vpop.xlane.xlu0 %1081
        %v1083 = vsel %vm785, %v1071, -inf
        %1084 = vmax.xlane.f32.xlu0 %v1083
        %v1085 = vpop.xlane.xlu0 %1084
        %v1086 = vsub.f32 %v855, %v1076
        %v1087 = vsub.f32 %v927, %v1079
        %v1088 = vsub.f32 %v999, %v1082
        %v1089 = vsub.f32 %v1071, %v1085
        %v1090 = vmul.f32 %v1086, 1.442695
        %v1091 = vpow.pop %v1090
        %v1092 = vmul.f32 %v1087, 1.442695
        %v1093 = vpow.pop %v1092
        %v1094 = vmul.f32 %v1088, 1.442695
        %v1095 = vpow.pop %v1094
        %v1096 = vmul.f32 %v1089, 1.442695
        %v1097 = vpow.pop %v1096
        %v1098 = vsel %vm785, %v1091, 0.0
        %1099 = vadd.xlane.f32.xlu0 %v1098
        %v1100 = vpop.xlane.xlu0 %1099
        %v1101 = vsel %vm785, %v1093, 0.0
        %1102 = vadd.xlane.f32.xlu0 %v1101
        %v1103 = vpop.xlane.xlu0 %1102
        %v1104 = vsel %vm785, %v1095, 0.0
        %1105 = vadd.xlane.f32.xlu0 %v1104
        %v1106 = vpop.xlane.xlu0 %1105
        %v1107 = vsel %vm785, %v1097, 0.0
        %1108 = vadd.xlane.f32.xlu0 %v1107
        %v1109 = vpop.xlane.xlu0 %1108
        %v1110 = vrcp.pop %v1100
        %v1111 = vrcp.pop %v1103
        %v1112 = vrcp.pop %v1106
        %v1113 = vrcp.pop %v1109
        %v1114 = vmul.f32 %v1091, %v1110
        %v1115 = vmul.f32 %v1093, %v1111
        %v1116 = vmul.f32 %v1095, %v1112
        %v1117 = vmul.f32 %v1097, %v1113
        %1118 = vst.msk [vmem:[%s457] sm:$0xff] %vm785, %v1114
        %1119 = vst.msk [vmem:[%s457 + $0x8] sm:$0xff] %vm785, %v1115
        %1120 = vst.msk [vmem:[%s457 + $0x10] sm:$0xff] %vm785, %v1116
        %1121 = vst.msk [vmem:[%s457 + $0x18] sm:$0xff] %vm785, %v1117
        %1122 = vrot.lane.b32.xlu0 %v646, 96
        %v1123 = vpop.permute.xlu0 %1122
        %1124 = vrot.lane.b32.xlu0 %v649, 96
        %v1125 = vpop.permute.xlu0 %1124
        %1126 = vrot.lane.b32.xlu0 %v652, 96
        %v1127 = vpop.permute.xlu0 %1126
        %1128 = vrot.lane.b32.xlu0 %v655, 96
        %v1129 = vpop.permute.xlu0 %1128
        %1134 = vxpose.xlu0.b32.start [1/16] %v1123, 128
        %1135 = vxpose.xlu0.b32.cont [2/16] 0.0, 128
        %1136 = vxpose.xlu0.b32.cont [3/16] 0.0, 128
        %1137 = vxpose.xlu0.b32.cont [4/16] 0.0, 128
        %1138 = vxpose.xlu0.b32.cont [5/16] 0.0, 128
        %1139 = vxpose.xlu0.b32.cont [6/16] 0.0, 128
        %1140 = vxpose.xlu0.b32.cont [7/16] 0.0, 128
        %1141 = vxpose.xlu0.b32.cont [8/16] 0.0, 128
        %1142 = vxpose.xlu0.b32.cont [9/16] 0.0, 128
        %1143 = vxpose.xlu0.b32.cont [10/16] 0.0, 128
        %1144 = vxpose.xlu0.b32.cont [11/16] 0.0, 128
        %1145 = vxpose.xlu0.b32.cont [12/16] 0.0, 128
        %1146 = vxpose.xlu0.b32.cont [13/16] 0.0, 128
        %1147 = vxpose.xlu0.b32.cont [14/16] 0.0, 128
        %1148 = vxpose.xlu0.b32.cont [15/16] 0.0, 128
        %1149 = vxpose.xlu0.b32.end [16/16] 0.0, 128
        %v1150 = vpop.trf.xlu0
        %v1151 = vpop.trf.xlu0
        %v1152 = vpop.trf.xlu0
        %v1153 = vpop.trf.xlu0
        %v1154 = vpop.trf.xlu0
        %v1155 = vpop.trf.xlu0
        %v1156 = vpop.trf.xlu0
        %v1157 = vpop.trf.xlu0
        %v1158 = vpop.trf.xlu0
        %v1159 = vpop.trf.xlu0
        %v1160 = vpop.trf.xlu0
        %v1161 = vpop.trf.xlu0
        %v1162 = vpop.trf.xlu0
        %v1163 = vpop.trf.xlu0
        %v1164 = vpop.trf.xlu0
        %v1165 = vpop.trf.xlu0
        %1166 = vxpose.xlu0.b32.start [1/16] %v1125, 128
        %1167 = vxpose.xlu0.b32.cont [2/16] 0.0, 128
        %1168 = vxpose.xlu0.b32.cont [3/16] 0.0, 128
        %1169 = vxpose.xlu0.b32.cont [4/16] 0.0, 128
        %1170 = vxpose.xlu0.b32.cont [5/16] 0.0, 128
        %1171 = vxpose.xlu0.b32.cont [6/16] 0.0, 128
        %1172 = vxpose.xlu0.b32.cont [7/16] 0.0, 128
        %1173 = vxpose.xlu0.b32.cont [8/16] 0.0, 128
        %1174 = vxpose.xlu0.b32.cont [9/16] 0.0, 128
        %1175 = vxpose.xlu0.b32.cont [10/16] 0.0, 128
        %1176 = vxpose.xlu0.b32.cont [11/16] 0.0, 128
        %1177 = vxpose.xlu0.b32.cont [12/16] 0.0, 128
        %1178 = vxpose.xlu0.b32.cont [13/16] 0.0, 128
        %1179 = vxpose.xlu0.b32.cont [14/16] 0.0, 128
        %1180 = vxpose.xlu0.b32.cont [15/16] 0.0, 128
        %1181 = vxpose.xlu0.b32.end [16/16] 0.0, 128
        %v1182 = vpop.trf.xlu0
        %v1183 = vpop.trf.xlu0
        %v1184 = vpop.trf.xlu0
        %v1185 = vpop.trf.xlu0
        %v1186 = vpop.trf.xlu0
        %v1187 = vpop.trf.xlu0
        %v1188 = vpop.trf.xlu0
        %v1189 = vpop.trf.xlu0
        %v1190 = vpop.trf.xlu0
        %v1191 = vpop.trf.xlu0
        %v1192 = vpop.trf.xlu0
        %v1193 = vpop.trf.xlu0
        %v1194 = vpop.trf.xlu0
        %v1195 = vpop.trf.xlu0
        %v1196 = vpop.trf.xlu0
        %v1197 = vpop.trf.xlu0
        %1198 = vxpose.xlu0.b32.start [1/16] %v1127, 128
        %1199 = vxpose.xlu0.b32.cont [2/16] 0.0, 128
        %1200 = vxpose.xlu0.b32.cont [3/16] 0.0, 128
        %1201 = vxpose.xlu0.b32.cont [4/16] 0.0, 128
        %1202 = vxpose.xlu0.b32.cont [5/16] 0.0, 128
        %1203 = vxpose.xlu0.b32.cont [6/16] 0.0, 128
        %1204 = vxpose.xlu0.b32.cont [7/16] 0.0, 128
        %1205 = vxpose.xlu0.b32.cont [8/16] 0.0, 128
        %1206 = vxpose.xlu0.b32.cont [9/16] 0.0, 128
        %1207 = vxpose.xlu0.b32.cont [10/16] 0.0, 128
        %1208 = vxpose.xlu0.b32.cont [11/16] 0.0, 128
        %1209 = vxpose.xlu0.b32.cont [12/16] 0.0, 128
        %1210 = vxpose.xlu0.b32.cont [13/16] 0.0, 128
        %1211 = vxpose.xlu0.b32.cont [14/16] 0.0, 128
        %1212 = vxpose.xlu0.b32.cont [15/16] 0.0, 128
        %1213 = vxpose.xlu0.b32.end [16/16] 0.0, 128
        %v1214 = vpop.trf.xlu0
        %v1215 = vpop.trf.xlu0
        %v1216 = vpop.trf.xlu0
        %v1217 = vpop.trf.xlu0
        %v1218 = vpop.trf.xlu0
        %v1219 = vpop.trf.xlu0
        %v1220 = vpop.trf.xlu0
        %v1221 = vpop.trf.xlu0
        %v1222 = vpop.trf.xlu0
        %v1223 = vpop.trf.xlu0
        %v1224 = vpop.trf.xlu0
        %v1225 = vpop.trf.xlu0
        %v1226 = vpop.trf.xlu0
        %v1227 = vpop.trf.xlu0
        %v1228 = vpop.trf.xlu0
        %v1229 = vpop.trf.xlu0
        %1230 = vxpose.xlu0.b32.start [1/16] %v1129, 128
        %1231 = vxpose.xlu0.b32.cont [2/16] 0.0, 128
        %1232 = vxpose.xlu0.b32.cont [3/16] 0.0, 128
        %1233 = vxpose.xlu0.b32.cont [4/16] 0.0, 128
        %1234 = vxpose.xlu0.b32.cont [5/16] 0.0, 128
        %1235 = vxpose.xlu0.b32.cont [6/16] 0.0, 128
        %1236 = vxpose.xlu0.b32.cont [7/16] 0.0, 128
        %1237 = vxpose.xlu0.b32.cont [8/16] 0.0, 128
        %1238 = vxpose.xlu0.b32.cont [9/16] 0.0, 128
        %1239 = vxpose.xlu0.b32.cont [10/16] 0.0, 128
        %1240 = vxpose.xlu0.b32.cont [11/16] 0.0, 128
        %1241 = vxpose.xlu0.b32.cont [12/16] 0.0, 128
        %1242 = vxpose.xlu0.b32.cont [13/16] 0.0, 128
        %1243 = vxpose.xlu0.b32.cont [14/16] 0.0, 128
        %1244 = vxpose.xlu0.b32.cont [15/16] 0.0, 128
        %1245 = vxpose.xlu0.b32.end [16/16] 0.0, 128
        %v1246 = vpop.trf.xlu0
        %v1247 = vpop.trf.xlu0
        %v1248 = vpop.trf.xlu0
        %v1249 = vpop.trf.xlu0
        %v1250 = vpop.trf.xlu0
        %v1251 = vpop.trf.xlu0
        %v1252 = vpop.trf.xlu0
        %v1253 = vpop.trf.xlu0
        %v1254 = vpop.trf.xlu0
        %v1255 = vpop.trf.xlu0
        %v1256 = vpop.trf.xlu0
        %v1257 = vpop.trf.xlu0
        %v1258 = vpop.trf.xlu0
        %v1259 = vpop.trf.xlu0
        %v1260 = vpop.trf.xlu0
        %v1261 = vpop.trf.xlu0
        %v1263 = vsel %vm785, %v1150, 0
        %v1266 = vsel %vm785, %v1114, 0
        %1268 = vmatprep.subr.mxu0 0.0
        %1269 = vmatpush1.xpose.msra.mxu0 %v1266
        %1270 = vmatprep.subr.mxu0 0.0
        %1271 = vmatpush1.xpose.msra.mxu0 0.0
        %1272 = vmatprep.subr.mxu0 0.0
        %1273 = vmatpush1.xpose.msra.mxu0 0.0
        %1274 = vmatprep.subr.mxu0 0.0
        %1275 = vmatpush1.xpose.msra.mxu0 0.0
        %1276 = vmatprep.subr.mxu0 0.0
        %1277 = vmatpush1.xpose.msra.mxu0 0.0
        %1278 = vmatprep.subr.mxu0 0.0
        %1279 = vmatpush1.xpose.msra.mxu0 0.0
        %1280 = vmatprep.subr.mxu0 0.0
        %1281 = vmatpush1.xpose.msra.mxu0 0.0
        %1282 = vmatprep.subr.mxu0 0.0
        %1283 = vmatpush1.xpose.msra.mxu0 0.0
        %1284 = vmatprep.subr.mxu0 0.0
        %1285 = vmatpush1.xpose.msra.mxu0 0.0
        %1286 = vmatprep.subr.mxu0 0.0
        %1287 = vmatpush1.xpose.msra.mxu0 0.0
        %1288 = vmatprep.subr.mxu0 0.0
        %1289 = vmatpush1.xpose.msra.mxu0 0.0
        %1290 = vmatprep.subr.mxu0 0.0
        %1291 = vmatpush1.xpose.msra.mxu0 0.0
        %1292 = vmatprep.subr.mxu0 0.0
        %1293 = vmatpush1.xpose.msra.mxu0 0.0
        %1294 = vmatprep.subr.mxu0 0.0
        %1295 = vmatpush1.xpose.msra.mxu0 0.0
        %1296 = vmatprep.subr.mxu0 0.0
        %1297 = vmatpush1.xpose.msra.mxu0 0.0
        %1298 = vmatprep.subr.mxu0 0.0
        %1299 = vmatpush1.xpose.msra.mxu0 0.0
        %1300 = vmatprep.subr.mxu0 0.0
        %1301 = vmatpush1.xpose.msra.mxu0 0.0
        %1302 = vmatprep.subr.mxu0 0.0
        %1303 = vmatpush1.xpose.msra.mxu0 0.0
        %1304 = vmatprep.subr.mxu0 0.0
        %1305 = vmatpush1.xpose.msra.mxu0 0.0
        %1306 = vmatprep.subr.mxu0 0.0
        %1307 = vmatpush1.xpose.msra.mxu0 0.0
        %1308 = vmatprep.subr.mxu0 0.0
        %1309 = vmatpush1.xpose.msra.mxu0 0.0
        %1310 = vmatprep.subr.mxu0 0.0
        %1311 = vmatpush1.xpose.msra.mxu0 0.0
        %1312 = vmatprep.subr.mxu0 0.0
        %1313 = vmatpush1.xpose.msra.mxu0 0.0
        %1314 = vmatprep.subr.mxu0 0.0
        %1315 = vmatpush1.xpose.msra.mxu0 0.0
        %1316 = vmatprep.subr.mxu0 0.0
        %1317 = vmatpush1.xpose.msra.mxu0 0.0
        %1318 = vmatprep.subr.mxu0 0.0
        %1319 = vmatpush1.xpose.msra.mxu0 0.0
        %1320 = vmatprep.subr.mxu0 0.0
        %1321 = vmatpush1.xpose.msra.mxu0 0.0
        %1322 = vmatprep.subr.mxu0 0.0
        %1323 = vmatpush1.xpose.msra.mxu0 0.0
        %1324 = vmatprep.subr.mxu0 0.0
        %1325 = vmatpush1.xpose.msra.mxu0 0.0
        %1326 = vmatprep.subr.mxu0 0.0
        %1327 = vmatpush1.xpose.msra.mxu0 0.0
        %1328 = vmatprep.subr.mxu0 0.0
        %1329 = vmatpush1.xpose.msra.mxu0 0.0
        %1330 = vmatprep.subr.mxu0 0.0
        %1331 = vmatpush1.xpose.msra.mxu0 0.0
        %1332 = vmatprep.mubr.f32.mxu0 0.0
        %1333 = vmatmul.mubr.f32.gmra.mrb[0].mxu0 %v1263
        %v1334 = vpop.f32.mrb[0].mxu0
        %v1335 = vadd.f32 0.0, %v1334
        %v1336 = vpop.f32.mrb[0].mxu0
        %1337 = vdwg.mxu0
        %v1339 = vsel %vm785, %v1182, 0
        %v1342 = vsel %vm785, %v1115, 0
        %1344 = vmatprep.subr.mxu0 0.0
        %1345 = vmatpush1.xpose.msra.mxu0 %v1342
        %1346 = vmatprep.subr.mxu0 0.0
        %1347 = vmatpush1.xpose.msra.mxu0 0.0
        %1348 = vmatprep.subr.mxu0 0.0
        %1349 = vmatpush1.xpose.msra.mxu0 0.0
        %1350 = vmatprep.subr.mxu0 0.0
        %1351 = vmatpush1.xpose.msra.mxu0 0.0
        %1352 = vmatprep.subr.mxu0 0.0
        %1353 = vmatpush1.xpose.msra.mxu0 0.0
        %1354 = vmatprep.subr.mxu0 0.0
        %1355 = vmatpush1.xpose.msra.mxu0 0.0
        %1356 = vmatprep.subr.mxu0 0.0
        %1357 = vmatpush1.xpose.msra.mxu0 0.0
        %1358 = vmatprep.subr.mxu0 0.0
        %1359 = vmatpush1.xpose.msra.mxu0 0.0
        %1360 = vmatprep.subr.mxu0 0.0
        %1361 = vmatpush1.xpose.msra.mxu0 0.0
        %1362 = vmatprep.subr.mxu0 0.0
        %1363 = vmatpush1.xpose.msra.mxu0 0.0
        %1364 = vmatprep.subr.mxu0 0.0
        %1365 = vmatpush1.xpose.msra.mxu0 0.0
        %1366 = vmatprep.subr.mxu0 0.0
        %1367 = vmatpush1.xpose.msra.mxu0 0.0
        %1368 = vmatprep.subr.mxu0 0.0
        %1369 = vmatpush1.xpose.msra.mxu0 0.0
        %1370 = vmatprep.subr.mxu0 0.0
        %1371 = vmatpush1.xpose.msra.mxu0 0.0
        %1372 = vmatprep.subr.mxu0 0.0
        %1373 = vmatpush1.xpose.msra.mxu0 0.0
        %1374 = vmatprep.subr.mxu0 0.0
        %1375 = vmatpush1.xpose.msra.mxu0 0.0
        %1376 = vmatprep.subr.mxu0 0.0
        %1377 = vmatpush1.xpose.msra.mxu0 0.0
        %1378 = vmatprep.subr.mxu0 0.0
        %1379 = vmatpush1.xpose.msra.mxu0 0.0
        %1380 = vmatprep.subr.mxu0 0.0
        %1381 = vmatpush1.xpose.msra.mxu0 0.0
        %1382 = vmatprep.subr.mxu0 0.0
        %1383 = vmatpush1.xpose.msra.mxu0 0.0
        %1384 = vmatprep.subr.mxu0 0.0
        %1385 = vmatpush1.xpose.msra.mxu0 0.0
        %1386 = vmatprep.subr.mxu0 0.0
        %1387 = vmatpush1.xpose.msra.mxu0 0.0
        %1388 = vmatprep.subr.mxu0 0.0
        %1389 = vmatpush1.xpose.msra.mxu0 0.0
        %1390 = vmatprep.subr.mxu0 0.0
        %1391 = vmatpush1.xpose.msra.mxu0 0.0
        %1392 = vmatprep.subr.mxu0 0.0
        %1393 = vmatpush1.xpose.msra.mxu0 0.0
        %1394 = vmatprep.subr.mxu0 0.0
        %1395 = vmatpush1.xpose.msra.mxu0 0.0
        %1396 = vmatprep.subr.mxu0 0.0
        %1397 = vmatpush1.xpose.msra.mxu0 0.0
        %1398 = vmatprep.subr.mxu0 0.0
        %1399 = vmatpush1.xpose.msra.mxu0 0.0
        %1400 = vmatprep.subr.mxu0 0.0
        %1401 = vmatpush1.xpose.msra.mxu0 0.0
        %1402 = vmatprep.subr.mxu0 0.0
        %1403 = vmatpush1.xpose.msra.mxu0 0.0
        %1404 = vmatprep.subr.mxu0 0.0
        %1405 = vmatpush1.xpose.msra.mxu0 0.0
        %1406 = vmatprep.subr.mxu0 0.0
        %1407 = vmatpush1.xpose.msra.mxu0 0.0
        %1408 = vmatprep.mubr.f32.mxu0 0.0
        %1409 = vmatmul.mubr.f32.gmra.mrb[0].mxu0 %v1339
        %v1410 = vpop.f32.mrb[0].mxu0
        %v1411 = vadd.f32 0.0, %v1410
        %v1412 = vpop.f32.mrb[0].mxu0
        %1413 = vdwg.mxu0
        %v1415 = vsel %vm785, %v1214, 0
        %v1418 = vsel %vm785, %v1116, 0
        %1420 = vmatprep.subr.mxu0 0.0
        %1421 = vmatpush1.xpose.msra.mxu0 %v1418
        %1422 = vmatprep.subr.mxu0 0.0
        %1423 = vmatpush1.xpose.msra.mxu0 0.0
        %1424 = vmatprep.subr.mxu0 0.0
        %1425 = vmatpush1.xpose.msra.mxu0 0.0
        %1426 = vmatprep.subr.mxu0 0.0
        %1427 = vmatpush1.xpose.msra.mxu0 0.0
        %1428 = vmatprep.subr.mxu0 0.0
        %1429 = vmatpush1.xpose.msra.mxu0 0.0
        %1430 = vmatprep.subr.mxu0 0.0
        %1431 = vmatpush1.xpose.msra.mxu0 0.0
        %1432 = vmatprep.subr.mxu0 0.0
        %1433 = vmatpush1.xpose.msra.mxu0 0.0
        %1434 = vmatprep.subr.mxu0 0.0
        %1435 = vmatpush1.xpose.msra.mxu0 0.0
        %1436 = vmatprep.subr.mxu0 0.0
        %1437 = vmatpush1.xpose.msra.mxu0 0.0
        %1438 = vmatprep.subr.mxu0 0.0
        %1439 = vmatpush1.xpose.msra.mxu0 0.0
        %1440 = vmatprep.subr.mxu0 0.0
        %1441 = vmatpush1.xpose.msra.mxu0 0.0
        %1442 = vmatprep.subr.mxu0 0.0
        %1443 = vmatpush1.xpose.msra.mxu0 0.0
        %1444 = vmatprep.subr.mxu0 0.0
        %1445 = vmatpush1.xpose.msra.mxu0 0.0
        %1446 = vmatprep.subr.mxu0 0.0
        %1447 = vmatpush1.xpose.msra.mxu0 0.0
        %1448 = vmatprep.subr.mxu0 0.0
        %1449 = vmatpush1.xpose.msra.mxu0 0.0
        %1450 = vmatprep.subr.mxu0 0.0
        %1451 = vmatpush1.xpose.msra.mxu0 0.0
        %1452 = vmatprep.subr.mxu0 0.0
        %1453 = vmatpush1.xpose.msra.mxu0 0.0
        %1454 = vmatprep.subr.mxu0 0.0
        %1455 = vmatpush1.xpose.msra.mxu0 0.0
        %1456 = vmatprep.subr.mxu0 0.0
        %1457 = vmatpush1.xpose.msra.mxu0 0.0
        %1458 = vmatprep.subr.mxu0 0.0
        %1459 = vmatpush1.xpose.msra.mxu0 0.0
        %1460 = vmatprep.subr.mxu0 0.0
        %1461 = vmatpush1.xpose.msra.mxu0 0.0
        %1462 = vmatprep.subr.mxu0 0.0
        %1463 = vmatpush1.xpose.msra.mxu0 0.0
        %1464 = vmatprep.subr.mxu0 0.0
        %1465 = vmatpush1.xpose.msra.mxu0 0.0
        %1466 = vmatprep.subr.mxu0 0.0
        %1467 = vmatpush1.xpose.msra.mxu0 0.0
        %1468 = vmatprep.subr.mxu0 0.0
        %1469 = vmatpush1.xpose.msra.mxu0 0.0
        %1470 = vmatprep.subr.mxu0 0.0
        %1471 = vmatpush1.xpose.msra.mxu0 0.0
        %1472 = vmatprep.subr.mxu0 0.0
        %1473 = vmatpush1.xpose.msra.mxu0 0.0
        %1474 = vmatprep.subr.mxu0 0.0
        %1475 = vmatpush1.xpose.msra.mxu0 0.0
        %1476 = vmatprep.subr.mxu0 0.0
        %1477 = vmatpush1.xpose.msra.mxu0 0.0
        %1478 = vmatprep.subr.mxu0 0.0
        %1479 = vmatpush1.xpose.msra.mxu0 0.0
        %1480 = vmatprep.subr.mxu0 0.0
        %1481 = vmatpush1.xpose.msra.mxu0 0.0
        %1482 = vmatprep.subr.mxu0 0.0
        %1483 = vmatpush1.xpose.msra.mxu0 0.0
        %1484 = vmatprep.mubr.f32.mxu0 0.0
        %1485 = vmatmul.mubr.f32.gmra.mrb[0].mxu0 %v1415
        %v1486 = vpop.f32.mrb[0].mxu0
        %v1487 = vadd.f32 0.0, %v1486
        %v1488 = vpop.f32.mrb[0].mxu0
        %1489 = vdwg.mxu0
        %v1491 = vsel %vm785, %v1246, 0
        %v1494 = vsel %vm785, %v1117, 0
        %1496 = vmatprep.subr.mxu0 0.0
        %1497 = vmatpush1.xpose.msra.mxu0 %v1494
        %1498 = vmatprep.subr.mxu0 0.0
        %1499 = vmatpush1.xpose.msra.mxu0 0.0
        %1500 = vmatprep.subr.mxu0 0.0
        %1501 = vmatpush1.xpose.msra.mxu0 0.0
        %1502 = vmatprep.subr.mxu0 0.0
        %1503 = vmatpush1.xpose.msra.mxu0 0.0
        %1504 = vmatprep.subr.mxu0 0.0
        %1505 = vmatpush1.xpose.msra.mxu0 0.0
        %1506 = vmatprep.subr.mxu0 0.0
        %1507 = vmatpush1.xpose.msra.mxu0 0.0
        %1508 = vmatprep.subr.mxu0 0.0
        %1509 = vmatpush1.xpose.msra.mxu0 0.0
        %1510 = vmatprep.subr.mxu0 0.0
        %1511 = vmatpush1.xpose.msra.mxu0 0.0
        %1512 = vmatprep.subr.mxu0 0.0
        %1513 = vmatpush1.xpose.msra.mxu0 0.0
        %1514 = vmatprep.subr.mxu0 0.0
        %1515 = vmatpush1.xpose.msra.mxu0 0.0
        %1516 = vmatprep.subr.mxu0 0.0
        %1517 = vmatpush1.xpose.msra.mxu0 0.0
        %1518 = vmatprep.subr.mxu0 0.0
        %1519 = vmatpush1.xpose.msra.mxu0 0.0
        %1520 = vmatprep.subr.mxu0 0.0
        %1521 = vmatpush1.xpose.msra.mxu0 0.0
        %1522 = vmatprep.subr.mxu0 0.0
        %1523 = vmatpush1.xpose.msra.mxu0 0.0
        %1524 = vmatprep.subr.mxu0 0.0
        %1525 = vmatpush1.xpose.msra.mxu0 0.0
        %1526 = vmatprep.subr.mxu0 0.0
        %1527 = vmatpush1.xpose.msra.mxu0 0.0
        %1528 = vmatprep.subr.mxu0 0.0
        %1529 = vmatpush1.xpose.msra.mxu0 0.0
        %1530 = vmatprep.subr.mxu0 0.0
        %1531 = vmatpush1.xpose.msra.mxu0 0.0
        %1532 = vmatprep.subr.mxu0 0.0
        %1533 = vmatpush1.xpose.msra.mxu0 0.0
        %1534 = vmatprep.subr.mxu0 0.0
        %1535 = vmatpush1.xpose.msra.mxu0 0.0
        %1536 = vmatprep.subr.mxu0 0.0
        %1537 = vmatpush1.xpose.msra.mxu0 0.0
        %1538 = vmatprep.subr.mxu0 0.0
        %1539 = vmatpush1.xpose.msra.mxu0 0.0
        %1540 = vmatprep.subr.mxu0 0.0
        %1541 = vmatpush1.xpose.msra.mxu0 0.0
        %1542 = vmatprep.subr.mxu0 0.0
        %1543 = vmatpush1.xpose.msra.mxu0 0.0
        %1544 = vmatprep.subr.mxu0 0.0
        %1545 = vmatpush1.xpose.msra.mxu0 0.0
        %1546 = vmatprep.subr.mxu0 0.0
        %1547 = vmatpush1.xpose.msra.mxu0 0.0
        %1548 = vmatprep.subr.mxu0 0.0
        %1549 = vmatpush1.xpose.msra.mxu0 0.0
        %1550 = vmatprep.subr.mxu0 0.0
        %1551 = vmatpush1.xpose.msra.mxu0 0.0
        %1552 = vmatprep.subr.mxu0 0.0
        %1553 = vmatpush1.xpose.msra.mxu0 0.0
        %1554 = vmatprep.subr.mxu0 0.0
        %1555 = vmatpush1.xpose.msra.mxu0 0.0
        %1556 = vmatprep.subr.mxu0 0.0
        %1557 = vmatpush1.xpose.msra.mxu0 0.0
        %1558 = vmatprep.subr.mxu0 0.0
        %1559 = vmatpush1.xpose.msra.mxu0 0.0
        %1560 = vmatprep.mubr.f32.mxu0 0.0
        %1561 = vmatmul.mubr.f32.gmra.mrb[0].mxu0 %v1491
        %v1562 = vpop.f32.mrb[0].mxu0
        %v1563 = vadd.f32 0.0, %v1562
        %v1564 = vpop.f32.mrb[0].mxu0
        %1565 = vdwg.mxu0
        %1566 = vxpose.xlu0.b32.start [1/16] %v1335, 128
        %1567 = vxpose.xlu0.b32.cont [2/16] 0.0, 128
        %1568 = vxpose.xlu0.b32.cont [3/16] 0.0, 128
        %1569 = vxpose.xlu0.b32.cont [4/16] 0.0, 128
        %1570 = vxpose.xlu0.b32.cont [5/16] 0.0, 128
        %1571 = vxpose.xlu0.b32.cont [6/16] 0.0, 128
        %1572 = vxpose.xlu0.b32.cont [7/16] 0.0, 128
        %1573 = vxpose.xlu0.b32.cont [8/16] 0.0, 128
        %1574 = vxpose.xlu0.b32.cont [9/16] 0.0, 128
        %1575 = vxpose.xlu0.b32.cont [10/16] 0.0, 128
        %1576 = vxpose.xlu0.b32.cont [11/16] 0.0, 128
        %1577 = vxpose.xlu0.b32.cont [12/16] 0.0, 128
        %1578 = vxpose.xlu0.b32.cont [13/16] 0.0, 128
        %1579 = vxpose.xlu0.b32.cont [14/16] 0.0, 128
        %1580 = vxpose.xlu0.b32.cont [15/16] 0.0, 128
        %1581 = vxpose.xlu0.b32.end [16/16] 0.0, 128
        %v1582 = vpop.trf.xlu0
        %v1583 = vpop.trf.xlu0
        %v1584 = vpop.trf.xlu0
        %v1585 = vpop.trf.xlu0
        %v1586 = vpop.trf.xlu0
        %v1587 = vpop.trf.xlu0
        %v1588 = vpop.trf.xlu0
        %v1589 = vpop.trf.xlu0
        %v1590 = vpop.trf.xlu0
        %v1591 = vpop.trf.xlu0
        %v1592 = vpop.trf.xlu0
        %v1593 = vpop.trf.xlu0
        %v1594 = vpop.trf.xlu0
        %v1595 = vpop.trf.xlu0
        %v1596 = vpop.trf.xlu0
        %v1597 = vpop.trf.xlu0
        %1598 = vxpose.xlu0.b32.start [1/16] %v1411, 128
        %1599 = vxpose.xlu0.b32.cont [2/16] 0.0, 128
        %1600 = vxpose.xlu0.b32.cont [3/16] 0.0, 128
        %1601 = vxpose.xlu0.b32.cont [4/16] 0.0, 128
        %1602 = vxpose.xlu0.b32.cont [5/16] 0.0, 128
        %1603 = vxpose.xlu0.b32.cont [6/16] 0.0, 128
        %1604 = vxpose.xlu0.b32.cont [7/16] 0.0, 128
        %1605 = vxpose.xlu0.b32.cont [8/16] 0.0, 128
        %1606 = vxpose.xlu0.b32.cont [9/16] 0.0, 128
        %1607 = vxpose.xlu0.b32.cont [10/16] 0.0, 128
        %1608 = vxpose.xlu0.b32.cont [11/16] 0.0, 128
        %1609 = vxpose.xlu0.b32.cont [12/16] 0.0, 128
        %1610 = vxpose.xlu0.b32.cont [13/16] 0.0, 128
        %1611 = vxpose.xlu0.b32.cont [14/16] 0.0, 128
        %1612 = vxpose.xlu0.b32.cont [15/16] 0.0, 128
        %1613 = vxpose.xlu0.b32.end [16/16] 0.0, 128
        %v1614 = vpop.trf.xlu0
        %v1615 = vpop.trf.xlu0
        %v1616 = vpop.trf.xlu0
        %v1617 = vpop.trf.xlu0
        %v1618 = vpop.trf.xlu0
        %v1619 = vpop.trf.xlu0
        %v1620 = vpop.trf.xlu0
        %v1621 = vpop.trf.xlu0
        %v1622 = vpop.trf.xlu0
        %v1623 = vpop.trf.xlu0
        %v1624 = vpop.trf.xlu0
        %v1625 = vpop.trf.xlu0
        %v1626 = vpop.trf.xlu0
        %v1627 = vpop.trf.xlu0
        %v1628 = vpop.trf.xlu0
        %v1629 = vpop.trf.xlu0
        %1630 = vxpose.xlu0.b32.start [1/16] %v1487, 128
        %1631 = vxpose.xlu0.b32.cont [2/16] 0.0, 128
        %1632 = vxpose.xlu0.b32.cont [3/16] 0.0, 128
        %1633 = vxpose.xlu0.b32.cont [4/16] 0.0, 128
        %1634 = vxpose.xlu0.b32.cont [5/16] 0.0, 128
        %1635 = vxpose.xlu0.b32.cont [6/16] 0.0, 128
        %1636 = vxpose.xlu0.b32.cont [7/16] 0.0, 128
        %1637 = vxpose.xlu0.b32.cont [8/16] 0.0, 128
        %1638 = vxpose.xlu0.b32.cont [9/16] 0.0, 128
        %1639 = vxpose.xlu0.b32.cont [10/16] 0.0, 128
        %1640 = vxpose.xlu0.b32.cont [11/16] 0.0, 128
        %1641 = vxpose.xlu0.b32.cont [12/16] 0.0, 128
        %1642 = vxpose.xlu0.b32.cont [13/16] 0.0, 128
        %1643 = vxpose.xlu0.b32.cont [14/16] 0.0, 128
        %1644 = vxpose.xlu0.b32.cont [15/16] 0.0, 128
        %1645 = vxpose.xlu0.b32.end [16/16] 0.0, 128
        %v1646 = vpop.trf.xlu0
        %v1647 = vpop.trf.xlu0
        %v1648 = vpop.trf.xlu0
        %v1649 = vpop.trf.xlu0
        %v1650 = vpop.trf.xlu0
        %v1651 = vpop.trf.xlu0
        %v1652 = vpop.trf.xlu0
        %v1653 = vpop.trf.xlu0
        %v1654 = vpop.trf.xlu0
        %v1655 = vpop.trf.xlu0
        %v1656 = vpop.trf.xlu0
        %v1657 = vpop.trf.xlu0
        %v1658 = vpop.trf.xlu0
        %v1659 = vpop.trf.xlu0
        %v1660 = vpop.trf.xlu0
        %v1661 = vpop.trf.xlu0
        %1662 = vxpose.xlu0.b32.start [1/16] %v1563, 128
        %1663 = vxpose.xlu0.b32.cont [2/16] 0.0, 128
        %1664 = vxpose.xlu0.b32.cont [3/16] 0.0, 128
        %1665 = vxpose.xlu0.b32.cont [4/16] 0.0, 128
        %1666 = vxpose.xlu0.b32.cont [5/16] 0.0, 128
        %1667 = vxpose.xlu0.b32.cont [6/16] 0.0, 128
        %1668 = vxpose.xlu0.b32.cont [7/16] 0.0, 128
        %1669 = vxpose.xlu0.b32.cont [8/16] 0.0, 128
        %1670 = vxpose.xlu0.b32.cont [9/16] 0.0, 128
        %1671 = vxpose.xlu0.b32.cont [10/16] 0.0, 128
        %1672 = vxpose.xlu0.b32.cont [11/16] 0.0, 128
        %1673 = vxpose.xlu0.b32.cont [12/16] 0.0, 128
        %1674 = vxpose.xlu0.b32.cont [13/16] 0.0, 128
        %1675 = vxpose.xlu0.b32.cont [14/16] 0.0, 128
        %1676 = vxpose.xlu0.b32.cont [15/16] 0.0, 128
        %1677 = vxpose.xlu0.b32.end [16/16] 0.0, 128
        %v1678 = vpop.trf.xlu0
        %v1679 = vpop.trf.xlu0
        %v1680 = vpop.trf.xlu0
        %v1681 = vpop.trf.xlu0
        %v1682 = vpop.trf.xlu0
        %v1683 = vpop.trf.xlu0
        %v1684 = vpop.trf.xlu0
        %v1685 = vpop.trf.xlu0
        %v1686 = vpop.trf.xlu0
        %v1687 = vpop.trf.xlu0
        %v1688 = vpop.trf.xlu0
        %v1689 = vpop.trf.xlu0
        %v1690 = vpop.trf.xlu0
        %v1691 = vpop.trf.xlu0
        %v1692 = vpop.trf.xlu0
        %v1693 = vpop.trf.xlu0
        %v1694 = vcombine.low %v1582, %v1646
        %v1695 = vcombine.high %v1582, %v1646
        %v1697 = vunpack.c.l.s4 1983009808
        %v1698 = vunpack.c.0.s8 %v1697
        %v1699 = vlaneseq
        %v1700 = vshrl.u32 %v1699, 7
        %v1701 = vsub.s32 %v1698, %v1700
        %v1702 = vrot.slane %v1694, %v1701
        %v1704 = vunpack.c.l.s4 1983009808
        %v1705 = vunpack.c.0.s8 %v1704
        %v1706 = vlaneseq
        %v1707 = vshrl.u32 %v1706, 7
        %v1708 = vsub.s32 %v1705, %v1707
        %v1709 = vrot.slane %v1695, %v1708
        %v1710 = vcombine.low %v1614, %v1678
        %v1711 = vcombine.high %v1614, %v1678
        %v1713 = vunpack.c.l.s4 1983009808
        %v1714 = vunpack.c.0.s8 %v1713
        %v1715 = vlaneseq
        %v1716 = vshrl.u32 %v1715, 7
        %v1717 = vsub.s32 %v1714, %v1716
        %v1718 = vrot.slane %v1710, %v1717
        %v1720 = vunpack.c.l.s4 1983009808
        %v1721 = vunpack.c.0.s8 %v1720
        %v1722 = vlaneseq
        %v1723 = vshrl.u32 %v1722, 7
        %v1724 = vsub.s32 %v1721, %v1723
        %v1725 = vrot.slane %v1711, %v1724
        %v1726 = vcombine.low %v1702, %v1718
        %v1727 = vcombine.high %v1702, %v1718
        %v1729 = vunpack.c.l.s4 1934713408
        %v1730 = vunpack.c.0.s8 %v1729
        %v1731 = vlaneseq
        %v1732 = vshrl.u32 %v1731, 7
        %v1733 = vsub.s32 %v1730, %v1732
        %v1734 = vrot.slane %v1726, %v1733
        %v1736 = vunpack.c.l.s4 1934713408
        %v1737 = vunpack.c.0.s8 %v1736
        %v1738 = vlaneseq
        %v1739 = vshrl.u32 %v1738, 7
        %v1740 = vsub.s32 %v1737, %v1739
        %v1741 = vrot.slane %v1727, %v1740
        %v1742 = vcombine.low %v1709, %v1725
        %v1743 = vcombine.high %v1709, %v1725
        %v1745 = vunpack.c.l.s4 1934713408
        %v1746 = vunpack.c.0.s8 %v1745
        %v1747 = vlaneseq
        %v1748 = vshrl.u32 %v1747, 7
        %v1749 = vsub.s32 %v1746, %v1748
        %v1750 = vrot.slane %v1742, %v1749
        %v1752 = vunpack.c.l.s4 1934713408
        %v1753 = vunpack.c.0.s8 %v1752
        %v1754 = vlaneseq
        %v1755 = vshrl.u32 %v1754, 7
        %v1756 = vsub.s32 %v1753, %v1755
        %v1757 = vrot.slane %v1743, %v1756
        %v1758 = vcombine.high %v1734, 0.0
        %v1759 = vcombine.high %v1741, 0.0
        %v1760 = vcombine.high %v1750, 0.0
        %v1761 = vcombine.high %v1757, 0.0
        %v1762 = vcombine.low %v1734, %v1741
        %v1764 = vunpack.c.l.s4 1983009808
        %v1765 = vunpack.c.0.s8 %v1764
        %v1766 = vlaneseq
        %v1767 = vshrl.u32 %v1766, 7
        %v1768 = vsub.s32 %v1765, %v1767
        %v1769 = vrot.slane %v1762, %v1768
        %v1770 = vcombine.low %v1758, %v1759
        %v1772 = vunpack.c.l.s4 1983009808
        %v1773 = vunpack.c.0.s8 %v1772
        %v1774 = vlaneseq
        %v1775 = vshrl.u32 %v1774, 7
        %v1776 = vsub.s32 %v1773, %v1775
        %v1777 = vrot.slane %v1770, %v1776
        %v1778 = vcombine.low %v1750, %v1757
        %v1780 = vunpack.c.l.s4 1983009808
        %v1781 = vunpack.c.0.s8 %v1780
        %v1782 = vlaneseq
        %v1783 = vshrl.u32 %v1782, 7
        %v1784 = vsub.s32 %v1781, %v1783
        %v1785 = vrot.slane %v1778, %v1784
        %v1786 = vcombine.low %v1760, %v1761
        %v1788 = vunpack.c.l.s4 1983009808
        %v1789 = vunpack.c.0.s8 %v1788
        %v1790 = vlaneseq
        %v1791 = vshrl.u32 %v1790, 7
        %v1792 = vsub.s32 %v1789, %v1791
        %v1793 = vrot.slane %v1786, %v1792
        %v1794 = vcombine.low %v1769, %v1777
        %v1795 = vcombine.high %v1769, %v1777
        %v1797 = vunpack.c.l.s4 1934713408
        %v1798 = vunpack.c.0.s8 %v1797
        %v1799 = vlaneseq
        %v1800 = vshrl.u32 %v1799, 7
        %v1801 = vsub.s32 %v1798, %v1800
        %v1802 = vrot.slane %v1794, %v1801
        %v1804 = vunpack.c.l.s4 1934713408
        %v1805 = vunpack.c.0.s8 %v1804
        %v1806 = vlaneseq
        %v1807 = vshrl.u32 %v1806, 7
        %v1808 = vsub.s32 %v1805, %v1807
        %v1809 = vrot.slane %v1795, %v1808
        %v1810 = vcombine.low %v1785, %v1793
        %v1811 = vcombine.high %v1785, %v1793
        %v1813 = vunpack.c.l.s4 1934713408
        %v1814 = vunpack.c.0.s8 %v1813
        %v1815 = vlaneseq
        %v1816 = vshrl.u32 %v1815, 7
        %v1817 = vsub.s32 %v1814, %v1816
        %v1818 = vrot.slane %v1810, %v1817
        %v1820 = vunpack.c.l.s4 1934713408
        %v1821 = vunpack.c.0.s8 %v1820
        %v1822 = vlaneseq
        %v1823 = vshrl.u32 %v1822, 7
        %v1824 = vsub.s32 %v1821, %v1823
        %v1825 = vrot.slane %v1811, %v1824
        %v1826 = vcombine.low %v1802, %v1818
        %v1827 = vcombine.high %v1802, %v1818
        %v1828 = vcombine.low %v1809, %v1825
        %v1829 = vcombine.high %v1809, %v1825
        %1831 = vrot.lane.b32.xlu0 %v1827, 8
        %v1832 = vpop.permute.xlu0 %1831
        %1835 = vrot.lane.b32.xlu0 %v1828, 16
        %v1836 = vpop.permute.xlu0 %1835
        %1839 = vrot.lane.b32.xlu0 %v1829, 24
        %v1840 = vpop.permute.xlu0 %1839
        %v1842 = vsel %vm785, %v1826, %v1832
        %vm1843 = vcmask 130048
        %v1844 = vsel %vm1843, %v1842, %v1836
        %vm1845 = vcmask 195584
        %v1846 = vsel %vm1845, %v1844, %v1840
        %1847 = vst.msk [vmem:[#allocation4] sm:$0xff] %vm562, %v1846
        %v1848 = vld [vmem:[#allocation4] sm:$0xff]
        %v1849 = vld [vmem:[#allocation13] sm:$0xff]
        %v1850 = vld [vmem:[#allocation13 + $0x8] sm:$0xff]
        %v1851 = vld [vmem:[#allocation13 + $0x10] sm:$0xff]
        %v1852 = vld [vmem:[#allocation13 + $0x18] sm:$0xff]
        %v1853 = vld [vmem:[%s7] sm:$0x1]
        %v1855 = vlaneseq
        %v1856 = vshrl.u32 %v1855, 7
        %v1857 = vsub.s32 0, %v1856
        %v1858 = vrot.slane %v1853, %v1857
        %v1861 = vsel %vm562, %v1848, 0
        %1863 = vmatprep.subr.mxu0 0.0
        %1864 = vmatpush1.msra.mxu0 %v1849
        %1865 = vmatprep.subr.mxu0 0.0
        %1866 = vmatpush1.msra.mxu0 %v1850
        %1867 = vmatprep.subr.mxu0 0.0
        %1868 = vmatpush1.msra.mxu0 %v1851
        %1869 = vmatprep.subr.mxu0 0.0
        %1870 = vmatpush1.msra.mxu0 %v1852
        %1871 = vmatprep.subr.mxu0 0.0
        %1872 = vmatpush1.msra.mxu0 0.0
        %1873 = vmatprep.subr.mxu0 0.0
        %1874 = vmatpush1.msra.mxu0 0.0
        %1875 = vmatprep.subr.mxu0 0.0
        %1876 = vmatpush1.msra.mxu0 0.0
        %1877 = vmatprep.subr.mxu0 0.0
        %1878 = vmatpush1.msra.mxu0 0.0
        %1879 = vmatprep.subr.mxu0 0.0
        %1880 = vmatpush1.msra.mxu0 0.0
        %1881 = vmatprep.subr.mxu0 0.0
        %1882 = vmatpush1.msra.mxu0 0.0
        %1883 = vmatprep.subr.mxu0 0.0
        %1884 = vmatpush1.msra.mxu0 0.0
        %1885 = vmatprep.subr.mxu0 0.0
        %1886 = vmatpush1.msra.mxu0 0.0
        %1887 = vmatprep.subr.mxu0 0.0
        %1888 = vmatpush1.msra.mxu0 0.0
        %1889 = vmatprep.subr.mxu0 0.0
        %1890 = vmatpush1.msra.mxu0 0.0
        %1891 = vmatprep.subr.mxu0 0.0
        %1892 = vmatpush1.msra.mxu0 0.0
        %1893 = vmatprep.subr.mxu0 0.0
        %1894 = vmatpush1.msra.mxu0 0.0
        %1895 = vmatprep.subr.mxu0 0.0
        %1896 = vmatpush1.msra.mxu0 0.0
        %1897 = vmatprep.subr.mxu0 0.0
        %1898 = vmatpush1.msra.mxu0 0.0
        %1899 = vmatprep.subr.mxu0 0.0
        %1900 = vmatpush1.msra.mxu0 0.0
        %1901 = vmatprep.subr.mxu0 0.0
        %1902 = vmatpush1.msra.mxu0 0.0
        %1903 = vmatprep.subr.mxu0 0.0
        %1904 = vmatpush1.msra.mxu0 0.0
        %1905 = vmatprep.subr.mxu0 0.0
        %1906 = vmatpush1.msra.mxu0 0.0
        %1907 = vmatprep.subr.mxu0 0.0
        %1908 = vmatpush1.msra.mxu0 0.0
        %1909 = vmatprep.subr.mxu0 0.0
        %1910 = vmatpush1.msra.mxu0 0.0
        %1911 = vmatprep.subr.mxu0 0.0
        %1912 = vmatpush1.msra.mxu0 0.0
        %1913 = vmatprep.subr.mxu0 0.0
        %1914 = vmatpush1.msra.mxu0 0.0
        %1915 = vmatprep.subr.mxu0 0.0
        %1916 = vmatpush1.msra.mxu0 0.0
        %1917 = vmatprep.subr.mxu0 0.0
        %1918 = vmatpush1.msra.mxu0 0.0
        %1919 = vmatprep.subr.mxu0 0.0
        %1920 = vmatpush1.msra.mxu0 0.0
        %1921 = vmatprep.subr.mxu0 0.0
        %1922 = vmatpush1.msra.mxu0 0.0
        %1923 = vmatprep.subr.mxu0 0.0
        %1924 = vmatpush1.msra.mxu0 0.0
        %1925 = vmatprep.subr.mxu0 0.0
        %1926 = vmatpush1.msra.mxu0 0.0
        %1927 = vmatprep.mubr.f32.mxu0 0.0
        %1928 = vmatmul.mubr.f32.gmra.mrb[0].mxu0 %v1861
        %v1929 = vpop.f32.mrb[0].mxu0
        %v1930 = vadd.f32 %v1858, %v1929
        %v1931 = vpop.f32.mrb[0].mxu0
        %1932 = vdwg.mxu0
        %1933 = vst.msk [vmem:[%s450] sm:$0xff] %vm562, %v1930
        %s1934 = sand.u32 %s236, 1
        %s1935 = scalar_lea.sflag [#allocation7], %s1934
        %s1936 = sand.u32 %s236, 1
        %s1937 = smul.addr %s1936, 8
        %s1938 = scalar_lea.vmem [#allocation14], %s1937
        %s1939 = sand.u32 %s264, 1
        %s1940 = scalar_lea.sflag [#allocation16], %s1939
        %s1941 = sand.u32 %s264, 1
        %s1942 = smul.addr %s1941, 32
        %s1943 = scalar_lea.vmem [#allocation15], %s1942
        // Predicated region
        $region77: #{tpu_custom_call.1} parent=51 // pred_check
          %p1944 = pneg %p246
        $region78: #{tpu_custom_call.1} parent=51 // pred_check_branch
          %1946 = sbr.rel (%p1944) target = $region80
        $region79: #{tpu_custom_call.1} parent=51 // pred_region
          %s1948 = ssub.s32 128, 128
          %1949 = vsyncadd %s1935, %s1948
          %s1950 = sadd.s32 %s39, %s38
          %s1951 = smul.addr %s1950, 128
          %s1952 = scalar_lea.hbm %s8, %s1951
          %s1954 = sshll.u32 %s1938, 4
          %s1955 = int_to_ptr.vmem [resolvable:$true] %s1954
          %1957 = dma.vmem_to_hbm [thread:$0]  %s1955, 128, %s1952, %s1935
        $region80: #{tpu_custom_call.1} parent=51 // pred_fallthru
          _
        // Predicated region
        $region81: #{tpu_custom_call.1} parent=51 // pred_check
          %p1958 = pneg %p274
        $region82: #{tpu_custom_call.1} parent=51 // pred_check_branch
          %1960 = sbr.rel (%p1958) target = $region84
        $region83: #{tpu_custom_call.1} parent=51 // pred_region
          %s1962 = ssub.s32 512, 512
          %1963 = vsyncadd %s1940, %s1962
          %s1964 = smul.addr %s38, 4
          %s1965 = sadd.s32 %s39, %s1964
          %s1966 = smul.addr %s1965, 128
          %s1967 = scalar_lea.hbm %s9, %s1966
          %s1968 = sshll.u32 %s1943, 4
          %s1969 = int_to_ptr.vmem [resolvable:$true] %s1968
          %1974 = dma.vmem_to_hbm [thread:$0]  %s1969, 512, %s1967, %s1940, 128, 128, 8
        $region84: #{tpu_custom_call.1} parent=51 // pred_fallthru
          _
      $region52: #{tpu_custom_call.1} parent=5 // pred_fallthru
        _
      %p1975 = scmp.le.s32.totalorder 2, %s29
      // Predicated region
      $region85: #{tpu_custom_call.1} parent=5 // pred_check
        %p1976 = pneg %p1975
      $region86: #{tpu_custom_call.1} parent=5 // pred_check_branch
        %1978 = sbr.rel (%p1976) target = $region88
      $region87: #{tpu_custom_call.1} parent=5 // pred_region
        %s1979 = ssub.s32 %s29, 2
        // Predicated region
        $region89: #{tpu_custom_call.1} parent=87 // pred_check
          %p1980 = pneg %p252
        $region90: #{tpu_custom_call.1} parent=87 // pred_check_branch
          %1982 = sbr.rel (%p1980) target = $region92
        $region91: #{tpu_custom_call.1} parent=87 // pred_region
          %s1983 = sand.u32 %s237, 1
          %s1984 = scalar_lea.sflag [#allocation7], %s1983
          %s1985 = sand.u32 %s237, 1
          %s1986 = smul.addr %s1985, 8
          %s1987 = scalar_lea.vmem [#allocation14], %s1986
          %1988 = dma.done %s1984, 128
        $region92: #{tpu_custom_call.1} parent=87 // pred_fallthru
          _
        // Predicated region
        $region93: #{tpu_custom_call.1} parent=87 // pred_check
          %p1989 = pneg %p280
        $region94: #{tpu_custom_call.1} parent=87 // pred_check_branch
          %1991 = sbr.rel (%p1989) target = $region96
        $region95: #{tpu_custom_call.1} parent=87 // pred_region
          %s1992 = sand.u32 %s265, 1
          %s1993 = scalar_lea.sflag [#allocation16], %s1992
          %s1994 = sand.u32 %s265, 1
          %s1995 = smul.addr %s1994, 32
          %s1996 = scalar_lea.vmem [#allocation15], %s1995
          %1997 = dma.done %s1993, 512
        $region96: #{tpu_custom_call.1} parent=87 // pred_fallthru
          _
      $region88: #{tpu_custom_call.1} parent=5 // pred_fallthru
        _
    $region6: #{tpu_custom_call.1} parent=1 // loop_footer
      %s33 = sadd.s32 1, %s29
    $region7: #{tpu_custom_call.1} parent=1 // loop_footer_branch
      %28 = sbr.rel target = $region3
    $region8: #{tpu_custom_call.1} parent=1 // loop_exit
      _
    %1998 = vsyncpa [#allocation6], 1
    %s1999 = scalar_lea.sflag [#allocation6], 1
    %2000 = vsyncpa %s1999, 1
    %2001 = vsyncpa [#allocation9], 1
    %s2002 = scalar_lea.sflag [#allocation9], 1
    %2003 = vsyncpa %s2002, 1
    %2004 = vsyncpa [#allocation12], 1
    %2005 = vsyncpa [#allocation7], 1
    %s2006 = scalar_lea.sflag [#allocation7], 1
    %2007 = vsyncpa %s2006, 1
    %2008 = vsyncpa [#allocation16], 1
    %s2009 = scalar_lea.sflag [#allocation16], 1
    %2010 = vsyncpa %s2009, 1

</llo_original>
